<compile_context>
chip_gen: v7x
topology: tpu7x:2x2x1
jax: 0.10.0
libtpu: 0.0.40
codegen_flags: <defaults>
</compile_context>

<pallas_src>
import functools

import numpy as np

import jax
import jax.numpy as jnp
from jax import lax
from jax.experimental import pallas as pl
from jax.experimental.pallas import tpu as pltpu


VMEM_SPEC = pl.BlockSpec(memory_space=pltpu.MemorySpace.VMEM)

TOKENS = jnp.array([1, 24, 5, 9, 17, 15, 26], dtype=jnp.int32)

# ---------------- packed-slab row offsets (all multiples of 8) ----------------
# wbig (bf16, width 1024): conv1(+pool fold) weights, conv1 bias, kron expand/tile mats
_W1_ROWS = 152            # rows   0:152  conv1 weights (147 real + 5 zero pad)
_B1_ROW = 152             # row  152      conv1 bias (tiled per position / corner)
_E_ROW = 160              # rows 160:176  z-expand matrix E
_T_ROW = 176              # rows 176:240  e-tile matrix T
_WBIG_ROWS = 240
# w64 (f32, width 64): conv3, hyper Bm / Wb / bb
_W3_ROW, _B3_ROW, _BM_ROW, _WB_ROW, _BB_ROW, _W64_ROWS = 0, 128, 136, 200, 216, 224
# w128 (f32, width 128): conv2 (+row pad), fused actor/critic heads
_W2_ROW, _B2_ROW, _H1W_ROW, _H1B_ROW, _H2W_ROW, _H2B_ROW, _W128_ROWS = (
    0, 256, 264, 328, 336, 464, 472)

_KP = 152                 # padded flat-image width (147 real pixels)


# ------------------------- fused forward kernel -------------------------

def _ac_fused_kernel(ximg_ref, zpack_ref, wbig_ref, wkron_ref, w64_ref, w128_ref,
                     out_ref, *, n_actions, n_samples, bp, sp):
    f32 = jnp.float32
    bf16 = jnp.bfloat16
    A = n_actions
    S = n_samples
    BP = bp
    SP = sp
    R = 2 * BP + SP       # total conv rows: obs | obs (dup) | exp

    # ---- image tower: conv1 (pool corners folded into weights) -> pool -> conv2 -> conv3
    x = ximg_ref[...].astype(bf16)                                   # (R, 152)
    w1 = wbig_ref[0:_W1_ROWS, :]                                     # (152, 1024) bf16
    b1 = wbig_ref[_B1_ROW:_B1_ROW + 1, :].astype(f32)                # (1, 1024)
    y1 = jnp.maximum(jnp.dot(x, w1, preferred_element_type=f32) + b1, 0.0)
    # 2x2 max-pool: 4 pool corners live in 4 vreg-aligned 256-lane chunks.
    pooled = jnp.maximum(jnp.maximum(y1[:, 0:256], y1[:, 256:512]),
                         jnp.maximum(y1[:, 512:768], y1[:, 768:1024]))   # (R, 256)

    w2 = w128_ref[_W2_ROW:_W2_ROW + 256, :]                          # (256, 128)
    b2 = w128_ref[_B2_ROW:_B2_ROW + 1, :]
    y2 = jnp.maximum(jnp.dot(pooled, w2, preferred_element_type=f32) + b2, 0.0)

    w3 = w64_ref[_W3_ROW:_W3_ROW + 128, :]                           # (128, 64)
    b3 = w64_ref[_B3_ROW:_B3_ROW + 1, :]
    emb = jnp.maximum(jnp.dot(y2, w3, preferred_element_type=f32) + b3, 0.0)   # (R, 64)

    # ---- hypernetwork, all three applications in one batch
    z_all = zpack_ref[0:R, 0:16]                                     # (R, 16) f32
    e_mat = wbig_ref[_E_ROW:_E_ROW + 16, :]                          # (16, 1024) bf16
    t_mat = wbig_ref[_T_ROW:_T_ROW + 64, :]                          # (64, 1024) bf16
    ze = jnp.dot(z_all.astype(bf16), e_mat, preferred_element_type=f32)   # z expanded
    et = jnp.dot(emb.astype(bf16), t_mat, preferred_element_type=f32)     # e tiled
    kz = (ze * et).astype(bf16)                                      # kron(z, e) (R, 1024)

    wmk = wkron_ref[...]                                             # (1024, 64) bf16
    bm = w64_ref[_BM_ROW:_BM_ROW + 64, :]
    wb = w64_ref[_WB_ROW:_WB_ROW + 16, :]
    bb = w64_ref[_BB_ROW:_BB_ROW + 1, :]
    hyp = (jnp.dot(kz, wmk, preferred_element_type=f32)
           + jnp.dot(emb, bm, preferred_element_type=f32)
           + jnp.dot(z_all, wb, preferred_element_type=f32) + bb)    # (R, 64)

    emb_hyper = hyp[0:BP, :]                                         # task1 / otask1
    query = hyp[BP:2 * BP, :]                                        # task2 / otask2
    key = hyp[2 * BP:2 * BP + SP, :]                                 # task2 / otask2 (exp)

    # ---- fused actor + critic heads (block-diag second layer)
    h1w = w128_ref[_H1W_ROW:_H1W_ROW + 64, :]                        # [a1w | c1w]
    h1b = w128_ref[_H1B_ROW:_H1B_ROW + 1, :]
    h2w = w128_ref[_H2W_ROW:_H2W_ROW + 128, :]                       # blkdiag(a2w, c2w)
    h2b = w128_ref[_H2B_ROW:_H2B_ROW + 1, :]
    h = jnp.tanh(jnp.dot(emb_hyper, h1w, preferred_element_type=f32) + h1b)   # (BP, 128)
    out2 = jnp.dot(h, h2w, preferred_element_type=f32) + h2b         # lanes[0:A]=logits, [A]=value

    # ---- episodic-memory attention (keys padded rows masked out)
    scores = lax.dot_general(query, key, (((1,), (1,)), ((), ())),
                             preferred_element_type=f32)             # (BP, SP)
    smask = lax.broadcasted_iota(jnp.int32, (BP, SP), 1) < S
    scores = jnp.where(smask, scores, -jnp.inf)
    m = jnp.max(scores, axis=1, keepdims=True)
    ew = jnp.exp(scores - m)
    attn = ew / jnp.sum(ew, axis=1, keepdims=True)                   # exact softmax
    lam = jnp.max(attn, axis=1, keepdims=True)                       # (BP, 1)
    ev = zpack_ref[R:R + 1, 0:SP]                                    # (1, SP)
    mv = jnp.sum(attn * ev, axis=1, keepdims=True)                   # (BP, 1)

    # ---- log-softmax over the action lanes + pack all outputs into one dense store
    lane = lax.broadcasted_iota(jnp.int32, (BP, 128), 1)
    amask = lane < A
    masked = jnp.where(amask, out2, -jnp.inf)
    ml = jnp.max(masked, axis=1, keepdims=True)
    lse = ml + jnp.log(jnp.sum(jnp.exp(masked - ml), axis=1, keepdims=True))
    res = jnp.where(amask, out2 - lse, out2)        # lanes<A: log-probs; lane A: value
    res = jnp.where(lane == A + 1, mv, res)         # lane A+1: memory_value
    res = jnp.where(lane == A + 2, lam, res)        # lane A+2: lam
    out_ref[...] = res


# ------------------------- parameter preparation -------------------------

def _conv_lift(in_h, in_w, in_c, ksize, positions):
    """Binary lifting tensors mapping a flat NHWC image row to per-position conv patches."""
    k_in = in_h * in_w * in_c
    p_len = ksize * ksize * in_c
    lift = np.zeros((len(positions), k_in, p_len), dtype=np.float32)
    for m, (i, j) in enumerate(positions):
        for kh in range(ksize):
            for kw in range(ksize):
                for c in range(in_c):
                    lift[m, ((i + kh) * in_w + (j + kw)) * in_c + c,
                         (kh * ksize + kw) * in_c + c] = 1.0
    return lift


# conv1 output positions grouped by 2x2 max-pool corner; within a corner the order
# is (pool_row, pool_col, channel) so pooling is a max over 4 lane chunks.
_POS1 = [(2 * io + di, 2 * jo + dj)
         for (di, dj) in ((0, 0), (0, 1), (1, 0), (1, 1))
         for io in range(3) for jo in range(3)]
_POS2 = [(p, q) for p in range(2) for q in range(2)]
_L1 = _conv_lift(7, 7, 3, 2, _POS1)      # (36, 147, 12)
_L2 = _conv_lift(3, 3, 16, 2, _POS2)     # (4, 144, 64)


def prepare_params(p, n_actions):
    """One-time transform of raw parameters into the packed fused-kernel slabs."""
    A = n_actions
    conv1_w = np.asarray(p["conv1_w"], np.float32)
    conv1_b = np.asarray(p["conv1_b"], np.float32)
    conv2_w = np.asarray(p["conv2_w"], np.float32)
    conv2_b = np.asarray(p["conv2_b"], np.float32)
    conv3_w = np.asarray(p["conv3_w"], np.float32)
    conv3_b = np.asarray(p["conv3_b"], np.float32)

    # --- wbig (bf16, 240 x 1024): conv1 fold (pool corners at lanes 0/256/512/768), E, T
    wbig = np.zeros((_WBIG_ROWS, 1024), np.float32)
    w1c_raw = np.einsum("mkp,pc->kmc", _L1, conv1_w)         # (147, 36, 16)
    for d in range(4):
        wbig[0:147, d * 256:d * 256 + 144] = w1c_raw[:, d * 9:(d + 1) * 9, :].reshape(147, 144)
        wbig[_B1_ROW, d * 256:d * 256 + 144] = np.tile(conv1_b, 9)
    for j in range(16):
        wbig[_E_ROW + j, j * 64:(j + 1) * 64] = 1.0                        # E[j, j*64+p] = 1
        wbig[_T_ROW:_T_ROW + 64, j * 64:(j + 1) * 64] = np.eye(64, dtype=np.float32)  # T[p, j*64+p]=1

    # --- wkron (bf16, 1024 x 64): Wm_kron[j*64+p, q] = hyper_m_w[j, p*64+q]
    wkron = np.asarray(p["hyper_m_w"], np.float32).reshape(1024, 64)

    # --- w64 (f32, 224 x 64): conv3 / b3 / Bm / Wb / bb
    w64 = np.zeros((_W64_ROWS, 64), np.float32)
    w64[_W3_ROW:_W3_ROW + 128] = conv3_w
    w64[_B3_ROW] = conv3_b
    w64[_BM_ROW:_BM_ROW + 64] = np.asarray(p["hyper_m_b"], np.float32).reshape(64, 64)
    w64[_WB_ROW:_WB_ROW + 16] = np.asarray(p["hyper_b_w"], np.float32)
    w64[_BB_ROW] = np.asarray(p["hyper_b_b"], np.float32)

    # --- w128 (f32, 472 x 128): conv2 fold, fused actor/critic heads
    w128 = np.zeros((_W128_ROWS, 128), np.float32)
    w128[_W2_ROW:_W2_ROW + 144] = np.einsum("mkp,pc->kmc", _L2, conv2_w).reshape(144, 128)
    w128[_B2_ROW] = np.tile(conv2_b, 4)
    w128[_H1W_ROW:_H1W_ROW + 64, 0:64] = np.asarray(p["actor1_w"], np.float32)
    w128[_H1W_ROW:_H1W_ROW + 64, 64:128] = np.asarray(p["critic1_w"], np.float32)
    w128[_H1B_ROW, 0:64] = np.asarray(p["actor1_b"], np.float32)
    w128[_H1B_ROW, 64:128] = np.asarray(p["critic1_b"], np.float32)
    w128[_H2W_ROW:_H2W_ROW + 64, 0:A] = np.asarray(p["actor2_w"], np.float32)
    w128[_H2W_ROW + 64:_H2W_ROW + 128, A:A + 1] = np.asarray(p["critic2_w"], np.float32)
    w128[_H2B_ROW, 0:A] = np.asarray(p["actor2_b"], np.float32)
    w128[_H2B_ROW, A] = np.asarray(p["critic2_b"], np.float32)[0]

    return {
        "wbig": jnp.asarray(wbig, jnp.bfloat16),
        "wkron": jnp.asarray(wkron, jnp.bfloat16),
        "w64": jnp.asarray(w64, jnp.float32),
        "w128": jnp.asarray(w128, jnp.float32),
        "task_emb": p["task_emb"],
        "otask1": p["otask1"],
        "otask2": p["otask2"],
    }


def init_ac_params(key, n_actions=7, task_dim=8, z_dim=8):
    ks = jax.random.split(key, 12)

    def lin(k, fan_in, fan_out):
        # matches init_params: normal(0,1) then row-normalize over the input dim, bias=0
        w = jax.random.normal(k, (fan_out, fan_in), dtype=jnp.float32)
        w = w / jnp.sqrt(jnp.sum(w * w, axis=1, keepdims=True))
        return w.T, jnp.zeros((fan_out,), jnp.float32)

    def conv(k, kh, kw, cin, cout, scale=0.1):
        # TODO(synk): patch order (kh, kw, c) channel-fastest; loading real PyTorch
        # Conv2d weights would require permuting the (cout, cin, kh, kw) layout first.
        w = scale * jax.random.normal(k, (kh * kw * cin, cout), dtype=jnp.float32)
        return w, jnp.zeros((cout,), jnp.float32)

    p = {}
    p["conv1_w"], p["conv1_b"] = conv(ks[0], 2, 2, 3, 16)
    p["conv2_w"], p["conv2_b"] = conv(ks[1], 2, 2, 16, 32)
    p["conv3_w"], p["conv3_b"] = conv(ks[2], 2, 2, 32, 64)
    p["actor1_w"], p["actor1_b"] = lin(ks[3], 64, 64)
    p["actor2_w"], p["actor2_b"] = lin(ks[4], 64, n_actions)
    p["critic1_w"], p["critic1_b"] = lin(ks[5], 64, 64)
    p["critic2_w"], p["critic2_b"] = lin(ks[6], 64, 1)
    # TODO(synk): original HyperNetwork class + task_lang.pt embeddings unavailable;
    # synthesized as two Linear heads on concat(task_embedding, otask) (z_dim=8 each).
    p["hyper_m_w"], p["hyper_m_b"] = lin(ks[7], task_dim + z_dim, 64 * 64)
    p["hyper_b_w"], p["hyper_b_b"] = lin(ks[8], task_dim + z_dim, 64)
    p["task_emb"] = jax.random.normal(ks[9], (7, task_dim), dtype=jnp.float32)
    p["otask1"] = jnp.eye(7, z_dim, dtype=jnp.float32)              # otask1_1..otask1_7
    p["otask2"] = p["otask1"].at[:, z_dim - 1].set(1.0)             # otask2_1..otask2_7
    return p


# ------------------------------ forward (wrapper) ------------------------------

def token_to_task_idx(first_tokens):
    # maps {1,24,5,9,17,15,26} -> 0..6 ; unknown tokens fall back to 0
    eq = first_tokens[:, None] == TOKENS[None, :]
    return jnp.argmax(eq, axis=1)


def _round_up8(n):
    return max(8, ((n + 7) // 8) * 8)


def ac_forward(pp, obs_image, obs_text, memory,
               exp_memory_state, exp_memory_value, exp_memory_text, sample_idx,
               n_actions=7):
    A = n_actions
    B = obs_image.shape[0]
    exp_state = exp_memory_state[sample_idx]                     # (S, 7, 7, 3)
    exp_value = exp_memory_value[sample_idx]                     # (S,)
    exp_text = exp_memory_text[sample_idx]                       # (S, T)
    S = exp_state.shape[0]
    BP = _round_up8(B)
    SP = _round_up8(S)
    R = 2 * BP + SP

    # obs rows duplicated so the conv output directly equals the stacked hyper input:
    # rows [0:BP]=obs (for task1), [BP:2BP]=obs (for task2 query), [2BP:2BP+SP]=exp (keys)
    obs_flat = obs_image.reshape(B, -1)
    exp_flat = exp_state.reshape(S, -1)
    K = obs_flat.shape[1]
    ximg = jnp.zeros((R, _KP), jnp.float32)
    ximg = ximg.at[0:B, 0:K].set(obs_flat)
    ximg = ximg.at[BP:BP + B, 0:K].set(obs_flat)
    ximg = ximg.at[2 * BP:2 * BP + S, 0:K].set(exp_flat)

    tidx = token_to_task_idx(obs_text.reshape(B, -1)[:, 0])
    kidx = token_to_task_idx(exp_text.reshape(S, -1)[:, 0])
    z1 = jnp.concatenate([pp["task_emb"][tidx], pp["otask1"][tidx]], axis=-1)   # (B, 16)
    z2q = jnp.concatenate([pp["task_emb"][tidx], pp["otask2"][tidx]], axis=-1)  # (B, 16)
    z2k = jnp.concatenate([pp["task_emb"][kidx], pp["otask2"][kidx]], axis=-1)  # (S, 16)

    # one packed per-step operand: rows [0:R] = stacked z, row R = experience values
    WZ = max(16, SP)
    zpack = jnp.zeros((R + 8, WZ), jnp.float32)
    zpack = zpack.at[0:B, 0:16].set(z1)
    zpack = zpack.at[BP:BP + B, 0:16].set(z2q)
    zpack = zpack.at[2 * BP:2 * BP + S, 0:16].set(z2k)
    zpack = zpack.at[R, 0:S].set(exp_value)

    kernel = functools.partial(_ac_fused_kernel, n_actions=A, n_samples=S, bp=BP, sp=SP)
    packed = pl.pallas_call(
        kernel,
        out_shape=jax.ShapeDtypeStruct((BP, 128), jnp.float32),
        in_specs=[VMEM_SPEC] * 6,
        out_specs=VMEM_SPEC,
    )(ximg, zpack, pp["wbig"], pp["wkron"], pp["w64"], pp["w128"])

    dist_log_probs = packed[:B, :A]
    value = packed[:B, A]
    memory_value = packed[:B, A + 1]
    lam = packed[:B, A + 2]
    return dist_log_probs, value, memory_value, lam, memory


ac_forward_jit = jax.jit(ac_forward, static_argnames=("n_actions",))


if __name__ == "__main__":
    root = jax.random.PRNGKey(0)
    kp, ki, kt, kes, kev, ket, ksmp = jax.random.split(root, 7)

    B, H, W, C = 2, 7, 7, 3          # obs_space['image'] = (7, 7, 3) -> embedding size 64
    T = 4
    N_EXP, SAMPLE_NUM = 50, 15
    N_ACTIONS = 7

    params = init_ac_params(kp, n_actions=N_ACTIONS)
    pp = prepare_params(params, n_actions=N_ACTIONS)

    obs_image = jax.random.uniform(ki, (B, H, W, C), dtype=jnp.float32)
    obs_text = jnp.concatenate(
        [jax.random.choice(kt, TOKENS, (B, 1)), jnp.zeros((B, T - 1), jnp.int32)], axis=1)
    memory = jnp.zeros((B, 128), jnp.float32)     # memory_size = 2 * 64

    exp_memory_state = jax.random.uniform(kes, (N_EXP, H, W, C), dtype=jnp.float32)
    exp_memory_value = jax.random.normal(kev, (N_EXP,), dtype=jnp.float32)
    exp_memory_text = jnp.concatenate(
        [jax.random.choice(ket, TOKENS, (N_EXP, 1)), jnp.zeros((N_EXP, T - 1), jnp.int32)],
        axis=1)

    # TODO(synk): reference uses random.sample(range(50), 15); replaced by a fixed-key draw.
    sample_idx = jax.random.choice(ksmp, N_EXP, (SAMPLE_NUM,), replace=False)

    outs = ac_forward_jit(pp, obs_image, obs_text, memory,
                          exp_memory_state, exp_memory_value, exp_memory_text, sample_idx,
                          n_actions=N_ACTIONS)
    outs = jax.block_until_ready(outs)

    dist_log_probs, value, memory_value, lam, memory_out = outs
    assert dist_log_probs.shape == (B, N_ACTIONS)
    assert value.shape == (B,)
    assert memory_value.shape == (B,)
    assert lam.shape == (B,)
    assert bool(jnp.all(jnp.isfinite(dist_log_probs)))
    print("KERNEL_OK")
</pallas_src>

<mosaic_0001>
module attributes {stable_mosaic.version = 11 : i64} {
  func.func @_ac_fused_kernel(%arg0: memref<32x152xf32, #tpu.memory_space<vmem>>, %arg1: memref<40x16xf32, #tpu.memory_space<vmem>>, %arg2: memref<240x1024xbf16, #tpu.memory_space<vmem>>, %arg3: memref<1024x64xbf16, #tpu.memory_space<vmem>>, %arg4: memref<224x64xf32, #tpu.memory_space<vmem>>, %arg5: memref<472x128xf32, #tpu.memory_space<vmem>>, %arg6: memref<8x128xf32, #tpu.memory_space<vmem>>) attributes {dimension_semantics = [], scalar_prefetch = 0 : i64, scratch_operands = 0 : i64, tpu.core_type = #tpu.core_type<tc>} {
    %c0 = arith.constant 0 : index
    %c0_0 = arith.constant 0 : index
    %0 = vector.load %arg0[%c0, %c0_0] : memref<32x152xf32, #tpu.memory_space<vmem>>, vector<32x152xf32>
    %1 = arith.truncf %0 : vector<32x152xf32> to vector<32x152xbf16>
    %c0_1 = arith.constant 0 : index
    %c0_2 = arith.constant 0 : index
    %2 = vector.load %arg2[%c0_1, %c0_2] : memref<240x1024xbf16, #tpu.memory_space<vmem>>, vector<152x1024xbf16>
    %c152 = arith.constant 152 : index
    %c0_3 = arith.constant 0 : index
    %3 = vector.load %arg2[%c152, %c0_3] : memref<240x1024xbf16, #tpu.memory_space<vmem>>, vector<1x1024xbf16>
    %4 = arith.extf %3 : vector<1x1024xbf16> to vector<1x1024xf32>
    %cst = arith.constant dense<0.000000e+00> : vector<32x1024xf32>
    %5 = tpu.matmul %1, %2, %cst {dimension_numbers = #tpu.dot_dimension_numbers<[1], [0], [0], [1], [0, 0, 1, 1], [], []>} : vector<32x152xbf16>, vector<152x1024xbf16>, vector<32x1024xf32> -> vector<32x1024xf32>
    %6 = vector.broadcast %4 : vector<1x1024xf32> to vector<32x1024xf32>
    %7 = arith.addf %5, %6 : vector<32x1024xf32>
    %cst_4 = arith.constant 0.000000e+00 : f32
    %8 = vector.broadcast %cst_4 : f32 to vector<32x1024xf32>
    %9 = arith.maximumf %7, %8 : vector<32x1024xf32>
    %10 = vector.extract_strided_slice %9 {offsets = [0, 0], sizes = [32, 256], strides = [1, 1]} : vector<32x1024xf32> to vector<32x256xf32>
    %11 = vector.extract_strided_slice %9 {offsets = [0, 256], sizes = [32, 256], strides = [1, 1]} : vector<32x1024xf32> to vector<32x256xf32>
    %12 = arith.maximumf %10, %11 : vector<32x256xf32>
    %13 = vector.extract_strided_slice %9 {offsets = [0, 512], sizes = [32, 256], strides = [1, 1]} : vector<32x1024xf32> to vector<32x256xf32>
    %14 = vector.extract_strided_slice %9 {offsets = [0, 768], sizes = [32, 256], strides = [1, 1]} : vector<32x1024xf32> to vector<32x256xf32>
    %15 = arith.maximumf %13, %14 : vector<32x256xf32>
    %16 = arith.maximumf %12, %15 : vector<32x256xf32>
    %c0_5 = arith.constant 0 : index
    %c0_6 = arith.constant 0 : index
    %17 = vector.load %arg5[%c0_5, %c0_6] : memref<472x128xf32, #tpu.memory_space<vmem>>, vector<256x128xf32>
    %c256 = arith.constant 256 : index
    %c0_7 = arith.constant 0 : index
    %18 = vector.load %arg5[%c256, %c0_7] : memref<472x128xf32, #tpu.memory_space<vmem>>, vector<1x128xf32>
    %cst_8 = arith.constant dense<0.000000e+00> : vector<32x128xf32>
    %19 = tpu.matmul %16, %17, %cst_8 {dimension_numbers = #tpu.dot_dimension_numbers<[1], [0], [0], [1], [0, 0, 1, 1], [], []>} : vector<32x256xf32>, vector<256x128xf32>, vector<32x128xf32> -> vector<32x128xf32>
    %20 = vector.broadcast %18 : vector<1x128xf32> to vector<32x128xf32>
    %21 = arith.addf %19, %20 : vector<32x128xf32>
    %cst_9 = arith.constant 0.000000e+00 : f32
    %22 = vector.broadcast %cst_9 : f32 to vector<32x128xf32>
    %23 = arith.maximumf %21, %22 : vector<32x128xf32>
    %c0_10 = arith.constant 0 : index
    %c0_11 = arith.constant 0 : index
    %24 = vector.load %arg4[%c0_10, %c0_11] : memref<224x64xf32, #tpu.memory_space<vmem>>, vector<128x64xf32>
    %c128 = arith.constant 128 : index
    %c0_12 = arith.constant 0 : index
    %25 = vector.load %arg4[%c128, %c0_12] : memref<224x64xf32, #tpu.memory_space<vmem>>, vector<1x64xf32>
    %cst_13 = arith.constant dense<0.000000e+00> : vector<32x64xf32>
    %26 = tpu.matmul %23, %24, %cst_13 {dimension_numbers = #tpu.dot_dimension_numbers<[1], [0], [0], [1], [0, 0, 1, 1], [], []>} : vector<32x128xf32>, vector<128x64xf32>, vector<32x64xf32> -> vector<32x64xf32>
    %27 = vector.broadcast %25 : vector<1x64xf32> to vector<32x64xf32>
    %28 = arith.addf %26, %27 : vector<32x64xf32>
    %cst_14 = arith.constant 0.000000e+00 : f32
    %29 = vector.broadcast %cst_14 : f32 to vector<32x64xf32>
    %30 = arith.maximumf %28, %29 : vector<32x64xf32>
    %c0_15 = arith.constant 0 : index
    %c0_16 = arith.constant 0 : index
    %31 = vector.load %arg1[%c0_15, %c0_16] : memref<40x16xf32, #tpu.memory_space<vmem>>, vector<32x16xf32>
    %c160 = arith.constant 160 : index
    %c0_17 = arith.constant 0 : index
    %32 = vector.load %arg2[%c160, %c0_17] : memref<240x1024xbf16, #tpu.memory_space<vmem>>, vector<16x1024xbf16>
    %c176 = arith.constant 176 : index
    %c0_18 = arith.constant 0 : index
    %33 = vector.load %arg2[%c176, %c0_18] : memref<240x1024xbf16, #tpu.memory_space<vmem>>, vector<64x1024xbf16>
    %34 = arith.truncf %31 : vector<32x16xf32> to vector<32x16xbf16>
    %cst_19 = arith.constant dense<0.000000e+00> : vector<32x1024xf32>
    %35 = tpu.matmul %34, %32, %cst_19 {dimension_numbers = #tpu.dot_dimension_numbers<[1], [0], [0], [1], [0, 0, 1, 1], [], []>} : vector<32x16xbf16>, vector<16x1024xbf16>, vector<32x1024xf32> -> vector<32x1024xf32>
    %36 = arith.truncf %30 : vector<32x64xf32> to vector<32x64xbf16>
    %cst_20 = arith.constant dense<0.000000e+00> : vector<32x1024xf32>
    %37 = tpu.matmul %36, %33, %cst_20 {dimension_numbers = #tpu.dot_dimension_numbers<[1], [0], [0], [1], [0, 0, 1, 1], [], []>} : vector<32x64xbf16>, vector<64x1024xbf16>, vector<32x1024xf32> -> vector<32x1024xf32>
    %38 = arith.mulf %35, %37 : vector<32x1024xf32>
    %39 = arith.truncf %38 : vector<32x1024xf32> to vector<32x1024xbf16>
    %c0_21 = arith.constant 0 : index
    %c0_22 = arith.constant 0 : index
    %40 = vector.load %arg3[%c0_21, %c0_22] : memref<1024x64xbf16, #tpu.memory_space<vmem>>, vector<1024x64xbf16>
    %c136 = arith.constant 136 : index
    %c0_23 = arith.constant 0 : index
    %41 = vector.load %arg4[%c136, %c0_23] : memref<224x64xf32, #tpu.memory_space<vmem>>, vector<64x64xf32>
    %c200 = arith.constant 200 : index
    %c0_24 = arith.constant 0 : index
    %42 = vector.load %arg4[%c200, %c0_24] : memref<224x64xf32, #tpu.memory_space<vmem>>, vector<16x64xf32>
    %c216 = arith.constant 216 : index
    %c0_25 = arith.constant 0 : index
    %43 = vector.load %arg4[%c216, %c0_25] : memref<224x64xf32, #tpu.memory_space<vmem>>, vector<1x64xf32>
    %cst_26 = arith.constant dense<0.000000e+00> : vector<32x64xf32>
    %44 = tpu.matmul %39, %40, %cst_26 {dimension_numbers = #tpu.dot_dimension_numbers<[1], [0], [0], [1], [0, 0, 1, 1], [], []>} : vector<32x1024xbf16>, vector<1024x64xbf16>, vector<32x64xf32> -> vector<32x64xf32>
    %cst_27 = arith.constant dense<0.000000e+00> : vector<32x64xf32>
    %45 = tpu.matmul %30, %41, %cst_27 {dimension_numbers = #tpu.dot_dimension_numbers<[1], [0], [0], [1], [0, 0, 1, 1], [], []>} : vector<32x64xf32>, vector<64x64xf32>, vector<32x64xf32> -> vector<32x64xf32>
    %46 = arith.addf %44, %45 : vector<32x64xf32>
    %cst_28 = arith.constant dense<0.000000e+00> : vector<32x64xf32>
    %47 = tpu.matmul %31, %42, %cst_28 {dimension_numbers = #tpu.dot_dimension_numbers<[1], [0], [0], [1], [0, 0, 1, 1], [], []>} : vector<32x16xf32>, vector<16x64xf32>, vector<32x64xf32> -> vector<32x64xf32>
    %48 = arith.addf %46, %47 : vector<32x64xf32>
    %49 = vector.broadcast %43 : vector<1x64xf32> to vector<32x64xf32>
    %50 = arith.addf %48, %49 : vector<32x64xf32>
    %51 = vector.extract_strided_slice %50 {offsets = [0, 0], sizes = [8, 64], strides = [1, 1]} : vector<32x64xf32> to vector<8x64xf32>
    %52 = vector.extract_strided_slice %50 {offsets = [8, 0], sizes = [8, 64], strides = [1, 1]} : vector<32x64xf32> to vector<8x64xf32>
    %53 = vector.extract_strided_slice %50 {offsets = [16, 0], sizes = [16, 64], strides = [1, 1]} : vector<32x64xf32> to vector<16x64xf32>
    %c264 = arith.constant 264 : index
    %c0_29 = arith.constant 0 : index
    %54 = vector.load %arg5[%c264, %c0_29] : memref<472x128xf32, #tpu.memory_space<vmem>>, vector<64x128xf32>
    %c328 = arith.constant 328 : index
    %c0_30 = arith.constant 0 : index
    %55 = vector.load %arg5[%c328, %c0_30] : memref<472x128xf32, #tpu.memory_space<vmem>>, vector<1x128xf32>
    %c336 = arith.constant 336 : index
    %c0_31 = arith.constant 0 : index
    %56 = vector.load %arg5[%c336, %c0_31] : memref<472x128xf32, #tpu.memory_space<vmem>>, vector<128x128xf32>
    %c464 = arith.constant 464 : index
    %c0_32 = arith.constant 0 : index
    %57 = vector.load %arg5[%c464, %c0_32] : memref<472x128xf32, #tpu.memory_space<vmem>>, vector<1x128xf32>
    %cst_33 = arith.constant dense<0.000000e+00> : vector<8x128xf32>
    %58 = tpu.matmul %51, %54, %cst_33 {dimension_numbers = #tpu.dot_dimension_numbers<[1], [0], [0], [1], [0, 0, 1, 1], [], []>} : vector<8x64xf32>, vector<64x128xf32>, vector<8x128xf32> -> vector<8x128xf32>
    %59 = vector.broadcast %55 : vector<1x128xf32> to vector<8x128xf32>
    %60 = arith.addf %58, %59 : vector<8x128xf32>
    %61 = math.tanh %60 : vector<8x128xf32>
    %cst_34 = arith.constant dense<0.000000e+00> : vector<8x128xf32>
    %62 = tpu.matmul %61, %56, %cst_34 {dimension_numbers = #tpu.dot_dimension_numbers<[1], [0], [0], [1], [0, 0, 1, 1], [], []>} : vector<8x128xf32>, vector<128x128xf32>, vector<8x128xf32> -> vector<8x128xf32>
    %63 = vector.broadcast %57 : vector<1x128xf32> to vector<8x128xf32>
    %64 = arith.addf %62, %63 : vector<8x128xf32>
    %cst_35 = arith.constant dense<0.000000e+00> : vector<8x16xf32>
    %65 = tpu.matmul %52, %53, %cst_35 {dimension_numbers = #tpu.dot_dimension_numbers<[1], [1], [0], [0], [0, 0, 1, 0], [], []>} : vector<8x64xf32>, vector<16x64xf32>, vector<8x16xf32> -> vector<8x16xf32>
    %66 = tpu.iota {dimensions = array<i32: 1>} : vector<8x16xi32>
    %c15_i32 = arith.constant 15 : i32
    %67 = vector.broadcast %c15_i32 : i32 to vector<8x16xi32>
    %68 = arith.cmpi slt, %66, %67 : vector<8x16xi32>
    %cst_36 = arith.constant 0xFF800000 : f32
    %69 = vector.broadcast %cst_36 : f32 to vector<8x16xf32>
    %70 = arith.select %68, %65, %69 : vector<8x16xi1>, vector<8x16xf32>
    %cst_37 = arith.constant dense<0xFF800000> : vector<8xf32>
    %71 = vector.multi_reduction <maximumf>, %70, %cst_37 [1] : vector<8x16xf32> to vector<8xf32>
    %72 = vector.shape_cast %71 : vector<8xf32> to vector<8x1xf32>
    %73 = vector.broadcast %72 : vector<8x1xf32> to vector<8x16xf32>
    %74 = arith.subf %70, %73 : vector<8x16xf32>
    %75 = math.exp %74 : vector<8x16xf32>
    %cst_38 = arith.constant dense<0.000000e+00> : vector<8xf32>
    %76 = vector.multi_reduction <add>, %75, %cst_38 [1] : vector<8x16xf32> to vector<8xf32>
    %77 = vector.shape_cast %76 : vector<8xf32> to vector<8x1xf32>
    %78 = vector.broadcast %77 : vector<8x1xf32> to vector<8x16xf32>
    %79 = arith.divf %75, %78 : vector<8x16xf32>
    %cst_39 = arith.constant dense<0xFF800000> : vector<8xf32>
    %80 = vector.multi_reduction <maximumf>, %79, %cst_39 [1] : vector<8x16xf32> to vector<8xf32>
    %81 = vector.shape_cast %80 : vector<8xf32> to vector<8x1xf32>
    %c32 = arith.constant 32 : index
    %c0_40 = arith.constant 0 : index
    %82 = vector.load %arg1[%c32, %c0_40] : memref<40x16xf32, #tpu.memory_space<vmem>>, vector<1x16xf32>
    %83 = vector.broadcast %82 : vector<1x16xf32> to vector<8x16xf32>
    %84 = arith.mulf %79, %83 : vector<8x16xf32>
    %cst_41 = arith.constant dense<0.000000e+00> : vector<8xf32>
    %85 = vector.multi_reduction <add>, %84, %cst_41 [1] : vector<8x16xf32> to vector<8xf32>
    %86 = vector.shape_cast %85 : vector<8xf32> to vector<8x1xf32>
    %87 = tpu.iota {dimensions = array<i32: 1>} : vector<8x128xi32>
    %c7_i32 = arith.constant 7 : i32
    %88 = vector.broadcast %c7_i32 : i32 to vector<8x128xi32>
    %89 = arith.cmpi slt, %87, %88 : vector<8x128xi32>
    %cst_42 = arith.constant 0xFF800000 : f32
    %90 = vector.broadcast %cst_42 : f32 to vector<8x128xf32>
    %91 = arith.select %89, %64, %90 : vector<8x128xi1>, vector<8x128xf32>
    %cst_43 = arith.constant dense<0xFF800000> : vector<8xf32>
    %92 = vector.multi_reduction <maximumf>, %91, %cst_43 [1] : vector<8x128xf32> to vector<8xf32>
    %93 = vector.shape_cast %92 : vector<8xf32> to vector<8x1xf32>
    %94 = vector.broadcast %93 : vector<8x1xf32> to vector<8x128xf32>
    %95 = arith.subf %91, %94 : vector<8x128xf32>
    %96 = math.exp %95 : vector<8x128xf32>
    %cst_44 = arith.constant dense<0.000000e+00> : vector<8xf32>
    %97 = vector.multi_reduction <add>, %96, %cst_44 [1] : vector<8x128xf32> to vector<8xf32>
    %98 = vector.shape_cast %97 : vector<8xf32> to vector<8x1xf32>
    %99 = math.log %98 : vector<8x1xf32>
    %100 = arith.addf %93, %99 : vector<8x1xf32>
    %101 = vector.broadcast %100 : vector<8x1xf32> to vector<8x128xf32>
    %102 = arith.subf %64, %101 : vector<8x128xf32>
    %103 = arith.select %89, %102, %64 : vector<8x128xi1>, vector<8x128xf32>
    %c8_i32 = arith.constant 8 : i32
    %104 = vector.broadcast %c8_i32 : i32 to vector<8x128xi32>
    %105 = arith.cmpi eq, %87, %104 : vector<8x128xi32>
    %106 = vector.shape_cast %86 : vector<8x1xf32> to vector<8x1xf32>
    %107 = vector.broadcast %106 : vector<8x1xf32> to vector<8x128xf32>
    %108 = arith.select %105, %107, %103 : vector<8x128xi1>, vector<8x128xf32>
    %c9_i32 = arith.constant 9 : i32
    %109 = vector.broadcast %c9_i32 : i32 to vector<8x128xi32>
    %110 = arith.cmpi eq, %87, %109 : vector<8x128xi32>
    %111 = vector.shape_cast %81 : vector<8x1xf32> to vector<8x1xf32>
    %112 = vector.broadcast %111 : vector<8x1xf32> to vector<8x128xf32>
    %113 = arith.select %110, %112, %108 : vector<8x128xi1>, vector<8x128xf32>
    %c0_45 = arith.constant 0 : index
    %c0_46 = arith.constant 0 : index
    %114 = vector.load %arg6[%c0_45, %c0_46] : memref<8x128xf32, #tpu.memory_space<vmem>>, vector<8x128xf32>
    tpu.vector_store %arg6[%c0_45, %c0_46], %113 {strides = array<i32>} : memref<8x128xf32, #tpu.memory_space<vmem>>, vector<8x128xf32>,
    return
  }
}

</mosaic_0001>

<llo_original>
// kernel: ac_forward.1
$region0: #{ac_forward.1}
  #allocation0 [shape = 'u32[]', space=smem, size = 0x4, offset = 0x4, fixed_abs, tag = 'smem constant byte address 0x4 - core index']
  #allocation1 [shape = 'u32[144,128]{1,0:T(1,128)}', space=vmem, size = 0x12000, scoped, tag = 'internal scratch']
  %s0 = inlined_call_operand.vmem [shape: f32[32,152], index: 0, kind: input, shape index: {}]
  %s1 = inlined_call_operand.vmem [shape: f32[40,16], index: 1, kind: input, shape index: {}]
  %s2 = inlined_call_operand.vmem [shape: bf16[240,1024], index: 2, kind: input, shape index: {}]
  %s3 = inlined_call_operand.vmem [shape: bf16[1024,64], index: 3, kind: input, shape index: {}]
  %s4 = inlined_call_operand.vmem [shape: f32[224,64], index: 4, kind: input, shape index: {}]
  %s5 = inlined_call_operand.vmem [shape: f32[472,128], index: 5, kind: input, shape index: {}]
  %s6 = inlined_call_operand.vmem [shape: f32[8,128], index: 6, kind: output, shape index: {}]
  %s7 = sld [smem:[#allocation0]]
  $region34: #{ac_forward.1} parent=0
    _
  %s9 = ssub.s32 1, %s7
  %s10 = scalar_select 0, %s9, %s7
  // Predicated region
  $region2: #{ac_forward.1} parent=0 // pred_check
    _
  $region3: #{ac_forward.1} parent=0 // pred_check_branch
    %12 = sbr.rel (0) target = $region5
  $region4: #{ac_forward.1} parent=0 // pred_region
    _
  $region5: #{ac_forward.1} parent=0 // pred_fallthru
    _
  // Predicated region
  $region6: #{ac_forward.1} parent=0 // pred_check
    _
  $region7: #{ac_forward.1} parent=0 // pred_check_branch
    %14 = sbr.rel (0) target = $region9
  $region8: #{ac_forward.1} parent=0 // pred_region
    _
  $region9: #{ac_forward.1} parent=0 // pred_fallthru
    _
  // Predicated region
  $region10: #{ac_forward.1} parent=0 // pred_check
    _
  $region11: #{ac_forward.1} parent=0 // pred_check_branch
    %16 = sbr.rel (0) target = $region13
  $region12: #{ac_forward.1} parent=0 // pred_region
    _
  $region13: #{ac_forward.1} parent=0 // pred_fallthru
    _
  // Predicated region
  $region14: #{ac_forward.1} parent=0 // pred_check
    _
  $region15: #{ac_forward.1} parent=0 // pred_check_branch
    %18 = sbr.rel (0) target = $region17
  $region16: #{ac_forward.1} parent=0 // pred_region
    _
  $region17: #{ac_forward.1} parent=0 // pred_fallthru
    _
  // Predicated region
  $region18: #{ac_forward.1} parent=0 // pred_check
    _
  $region19: #{ac_forward.1} parent=0 // pred_check_branch
    %20 = sbr.rel (0) target = $region21
  $region20: #{ac_forward.1} parent=0 // pred_region
    _
  $region21: #{ac_forward.1} parent=0 // pred_fallthru
    _
  // Predicated region
  $region22: #{ac_forward.1} parent=0 // pred_check
    _
  $region23: #{ac_forward.1} parent=0 // pred_check_branch
    %22 = sbr.rel (0) target = $region25
  $region24: #{ac_forward.1} parent=0 // pred_region
    _
  $region25: #{ac_forward.1} parent=0 // pred_fallthru
    _
  %v24 = vld [vmem:[%s0] sm:$0xff]
  %v25 = vld [vmem:[%s0 + $0x8] sm:$0xff]
  %v26 = vld [vmem:[%s0 + $0x10] sm:$0xff]
  %v27 = vld [vmem:[%s0 + $0x18] sm:$0xff]
  %v28 = vld [vmem:[%s0 + $0x20] sm:$0xff]
  %v29 = vld [vmem:[%s0 + $0x28] sm:$0xff]
  %v30 = vld [vmem:[%s0 + $0x30] sm:$0xff]
  %v31 = vld [vmem:[%s0 + $0x38] sm:$0xff]
  %v32 = vpack.c.bf16 %v26, %v24
  %v33 = vpack.c.bf16 %v27, %v25
  %v34 = vpack.c.bf16 %v30, %v28
  %v35 = vpack.c.bf16 %v31, %v29
  %v36 = vld [vmem:[%s2] sm:$0xff]
  %v37 = vld [vmem:[%s2 + $0x8] sm:$0xff]
  %v38 = vld [vmem:[%s2 + $0x10] sm:$0xff]
  %v39 = vld [vmem:[%s2 + $0x18] sm:$0xff]
  %v40 = vld [vmem:[%s2 + $0x20] sm:$0xff]
  %v41 = vld [vmem:[%s2 + $0x28] sm:$0xff]
  %v42 = vld [vmem:[%s2 + $0x30] sm:$0xff]
  %v43 = vld [vmem:[%s2 + $0x38] sm:$0xff]
  %v44 = vld [vmem:[%s2 + $0x40] sm:$0xff]
  %v45 = vld [vmem:[%s2 + $0x48] sm:$0xff]
  %v46 = vld [vmem:[%s2 + $0x50] sm:$0xff]
  %v47 = vld [vmem:[%s2 + $0x58] sm:$0xff]
  %v48 = vld [vmem:[%s2 + $0x60] sm:$0xff]
  %v49 = vld [vmem:[%s2 + $0x68] sm:$0xff]
  %v50 = vld [vmem:[%s2 + $0x70] sm:$0xff]
  %v51 = vld [vmem:[%s2 + $0x78] sm:$0xff]
  %v52 = vld [vmem:[%s2 + $0x80] sm:$0xff]
  %v53 = vld [vmem:[%s2 + $0x88] sm:$0xff]
  %v54 = vld [vmem:[%s2 + $0x90] sm:$0xff]
  %v55 = vld [vmem:[%s2 + $0x98] sm:$0xff]
  %v56 = vld [vmem:[%s2 + $0xa0] sm:$0xff]
  %v57 = vld [vmem:[%s2 + $0xa8] sm:$0xff]
  %v58 = vld [vmem:[%s2 + $0xb0] sm:$0xff]
  %v59 = vld [vmem:[%s2 + $0xb8] sm:$0xff]
  %v60 = vld [vmem:[%s2 + $0xc0] sm:$0xff]
  %v61 = vld [vmem:[%s2 + $0xc8] sm:$0xff]
  %v62 = vld [vmem:[%s2 + $0xd0] sm:$0xff]
  %v63 = vld [vmem:[%s2 + $0xd8] sm:$0xff]
  %v64 = vld [vmem:[%s2 + $0xe0] sm:$0xff]
  %v65 = vld [vmem:[%s2 + $0xe8] sm:$0xff]
  %v66 = vld [vmem:[%s2 + $0xf0] sm:$0xff]
  %v67 = vld [vmem:[%s2 + $0xf8] sm:$0xff]
  %v68 = vld [vmem:[%s2 + $0x100] sm:$0xff]
  %v69 = vld [vmem:[%s2 + $0x108] sm:$0xff]
  %v70 = vld [vmem:[%s2 + $0x110] sm:$0xff]
  %v71 = vld [vmem:[%s2 + $0x118] sm:$0xff]
  %v72 = vld [vmem:[%s2 + $0x120] sm:$0xff]
  %v73 = vld [vmem:[%s2 + $0x128] sm:$0xff]
  %v74 = vld [vmem:[%s2 + $0x130] sm:$0xff]
  %v75 = vld [vmem:[%s2 + $0x138] sm:$0xff]
  %v76 = vld [vmem:[%s2 + $0x140] sm:$0xff]
  %v77 = vld [vmem:[%s2 + $0x148] sm:$0xff]
  %v78 = vld [vmem:[%s2 + $0x150] sm:$0xff]
  %v79 = vld [vmem:[%s2 + $0x158] sm:$0xff]
  %v80 = vld [vmem:[%s2 + $0x160] sm:$0xff]
  %v81 = vld [vmem:[%s2 + $0x168] sm:$0xff]
  %v82 = vld [vmem:[%s2 + $0x170] sm:$0xff]
  %v83 = vld [vmem:[%s2 + $0x178] sm:$0xff]
  %v84 = vld [vmem:[%s2 + $0x180] sm:$0xff]
  %v85 = vld [vmem:[%s2 + $0x188] sm:$0xff]
  %v86 = vld [vmem:[%s2 + $0x190] sm:$0xff]
  %v87 = vld [vmem:[%s2 + $0x198] sm:$0xff]
  %v88 = vld [vmem:[%s2 + $0x1a0] sm:$0xff]
  %v89 = vld [vmem:[%s2 + $0x1a8] sm:$0xff]
  %v90 = vld [vmem:[%s2 + $0x1b0] sm:$0xff]
  %v91 = vld [vmem:[%s2 + $0x1b8] sm:$0xff]
  %v92 = vld [vmem:[%s2 + $0x1c0] sm:$0xff]
  %v93 = vld [vmem:[%s2 + $0x1c8] sm:$0xff]
  %v94 = vld [vmem:[%s2 + $0x1d0] sm:$0xff]
  %v95 = vld [vmem:[%s2 + $0x1d8] sm:$0xff]
  %v96 = vld [vmem:[%s2 + $0x1e0] sm:$0xff]
  %v97 = vld [vmem:[%s2 + $0x1e8] sm:$0xff]
  %v98 = vld [vmem:[%s2 + $0x1f0] sm:$0xff]
  %v99 = vld [vmem:[%s2 + $0x1f8] sm:$0xff]
  %v100 = vld [vmem:[%s2 + $0x200] sm:$0xff]
  %v101 = vld [vmem:[%s2 + $0x208] sm:$0xff]
  %v102 = vld [vmem:[%s2 + $0x210] sm:$0xff]
  %v103 = vld [vmem:[%s2 + $0x218] sm:$0xff]
  %v104 = vld [vmem:[%s2 + $0x220] sm:$0xff]
  %v105 = vld [vmem:[%s2 + $0x228] sm:$0xff]
  %v106 = vld [vmem:[%s2 + $0x230] sm:$0xff]
  %v107 = vld [vmem:[%s2 + $0x238] sm:$0xff]
  %v108 = vld [vmem:[%s2 + $0x240] sm:$0xff]
  %v109 = vld [vmem:[%s2 + $0x248] sm:$0xff]
  %v110 = vld [vmem:[%s2 + $0x250] sm:$0xff]
  %v111 = vld [vmem:[%s2 + $0x258] sm:$0xff]
  %v112 = vld [vmem:[%s2 + $0x260] sm:$0x11]
  %v113 = vld [vmem:[%s2 + $0x268] sm:$0x11]
  %v114 = vld [vmem:[%s2 + $0x270] sm:$0x11]
  %v115 = vld [vmem:[%s2 + $0x278] sm:$0x11]
  %v116 = vunpack.c.l.bf16 %v112
  %v117 = vunpack.c.h.bf16 %v112
  %v118 = vunpack.c.l.bf16 %v113
  %v119 = vunpack.c.h.bf16 %v113
  %v120 = vunpack.c.l.bf16 %v114
  %v121 = vunpack.c.h.bf16 %v114
  %v122 = vunpack.c.l.bf16 %v115
  %v123 = vunpack.c.h.bf16 %v115
  %v124 = vlaneseq
  %v125 = vshrl.u32 %v124, 7
  %v126 = vsub.s32 0, %v125
  %v127 = vrot.slane %v116, %v126
  %v128 = vlaneseq
  %v129 = vshrl.u32 %v128, 7
  %v130 = vsub.s32 0, %v129
  %v131 = vrot.slane %v117, %v130
  %v132 = vlaneseq
  %v133 = vshrl.u32 %v132, 7
  %v134 = vsub.s32 0, %v133
  %v135 = vrot.slane %v118, %v134
  %v136 = vlaneseq
  %v137 = vshrl.u32 %v136, 7
  %v138 = vsub.s32 0, %v137
  %v139 = vrot.slane %v119, %v138
  %v140 = vlaneseq
  %v141 = vshrl.u32 %v140, 7
  %v142 = vsub.s32 0, %v141
  %v143 = vrot.slane %v120, %v142
  %v144 = vlaneseq
  %v145 = vshrl.u32 %v144, 7
  %v146 = vsub.s32 0, %v145
  %v147 = vrot.slane %v121, %v146
  %v148 = vlaneseq
  %v149 = vshrl.u32 %v148, 7
  %v150 = vsub.s32 0, %v149
  %v151 = vrot.slane %v122, %v150
  %v152 = vlaneseq
  %v153 = vshrl.u32 %v152, 7
  %v154 = vsub.s32 0, %v153
  %v155 = vrot.slane %v123, %v154
  %v232 = vunpack.c.l.b16 %v36
  %v233 = vunpack.c.h.b16 %v36
  %v234 = vunpack.c.l.b16 %v37
  %v235 = vunpack.c.h.b16 %v37
  %v236 = vunpack.c.l.b16 %v38
  %v237 = vunpack.c.h.b16 %v38
  %v238 = vunpack.c.l.b16 %v39
  %v239 = vunpack.c.h.b16 %v39
  %v240 = vunpack.c.l.b16 %v40
  %v241 = vunpack.c.h.b16 %v40
  %v242 = vunpack.c.l.b16 %v41
  %v243 = vunpack.c.h.b16 %v41
  %v244 = vunpack.c.l.b16 %v42
  %v245 = vunpack.c.h.b16 %v42
  %v246 = vunpack.c.l.b16 %v43
  %v247 = vunpack.c.h.b16 %v43
  %v248 = vunpack.c.l.b16 %v44
  %v249 = vunpack.c.h.b16 %v44
  %v250 = vunpack.c.l.b16 %v45
  %v251 = vunpack.c.h.b16 %v45
  %v252 = vunpack.c.l.b16 %v46
  %v253 = vunpack.c.h.b16 %v46
  %v254 = vunpack.c.l.b16 %v47
  %v255 = vunpack.c.h.b16 %v47
  %v256 = vunpack.c.l.b16 %v48
  %v257 = vunpack.c.h.b16 %v48
  %v258 = vunpack.c.l.b16 %v49
  %v259 = vunpack.c.h.b16 %v49
  %v260 = vunpack.c.l.b16 %v50
  %v261 = vunpack.c.h.b16 %v50
  %v262 = vunpack.c.l.b16 %v51
  %v263 = vunpack.c.h.b16 %v51
  %v264 = vunpack.c.l.b16 %v52
  %v265 = vunpack.c.h.b16 %v52
  %v266 = vunpack.c.l.b16 %v53
  %v267 = vunpack.c.h.b16 %v53
  %v268 = vunpack.c.l.b16 %v54
  %v269 = vunpack.c.h.b16 %v54
  %v270 = vunpack.c.l.b16 %v55
  %v271 = vunpack.c.h.b16 %v55
  %v272 = vunpack.c.l.b16 %v56
  %v273 = vunpack.c.h.b16 %v56
  %v274 = vunpack.c.l.b16 %v57
  %v275 = vunpack.c.h.b16 %v57
  %v276 = vunpack.c.l.b16 %v58
  %v277 = vunpack.c.h.b16 %v58
  %v278 = vunpack.c.l.b16 %v59
  %v279 = vunpack.c.h.b16 %v59
  %v280 = vunpack.c.l.b16 %v60
  %v281 = vunpack.c.h.b16 %v60
  %v282 = vunpack.c.l.b16 %v61
  %v283 = vunpack.c.h.b16 %v61
  %v284 = vunpack.c.l.b16 %v62
  %v285 = vunpack.c.h.b16 %v62
  %v286 = vunpack.c.l.b16 %v63
  %v287 = vunpack.c.h.b16 %v63
  %v288 = vunpack.c.l.b16 %v64
  %v289 = vunpack.c.h.b16 %v64
  %v290 = vunpack.c.l.b16 %v65
  %v291 = vunpack.c.h.b16 %v65
  %v292 = vunpack.c.l.b16 %v66
  %v293 = vunpack.c.h.b16 %v66
  %v294 = vunpack.c.l.b16 %v67
  %v295 = vunpack.c.h.b16 %v67
  %v296 = vunpack.c.l.b16 %v68
  %v297 = vunpack.c.h.b16 %v68
  %v298 = vunpack.c.l.b16 %v69
  %v299 = vunpack.c.h.b16 %v69
  %v300 = vunpack.c.l.b16 %v70
  %v301 = vunpack.c.h.b16 %v70
  %v302 = vunpack.c.l.b16 %v71
  %v303 = vunpack.c.h.b16 %v71
  %v304 = vunpack.c.l.b16 %v72
  %v305 = vunpack.c.h.b16 %v72
  %v306 = vunpack.c.l.b16 %v73
  %v307 = vunpack.c.h.b16 %v73
  %v308 = vunpack.c.l.b16 %v74
  %v309 = vunpack.c.h.b16 %v74
  %v310 = vunpack.c.l.b16 %v75
  %v311 = vunpack.c.h.b16 %v75
  %v312 = vunpack.c.l.b16 %v76
  %v313 = vunpack.c.h.b16 %v76
  %v314 = vunpack.c.l.b16 %v77
  %v315 = vunpack.c.h.b16 %v77
  %v316 = vunpack.c.l.b16 %v78
  %v317 = vunpack.c.h.b16 %v78
  %v318 = vunpack.c.l.b16 %v79
  %v319 = vunpack.c.h.b16 %v79
  %v320 = vunpack.c.l.b16 %v80
  %v321 = vunpack.c.h.b16 %v80
  %v322 = vunpack.c.l.b16 %v81
  %v323 = vunpack.c.h.b16 %v81
  %v324 = vunpack.c.l.b16 %v82
  %v325 = vunpack.c.h.b16 %v82
  %v326 = vunpack.c.l.b16 %v83
  %v327 = vunpack.c.h.b16 %v83
  %v328 = vunpack.c.l.b16 %v84
  %v329 = vunpack.c.h.b16 %v84
  %v330 = vunpack.c.l.b16 %v85
  %v331 = vunpack.c.h.b16 %v85
  %v332 = vunpack.c.l.b16 %v86
  %v333 = vunpack.c.h.b16 %v86
  %v334 = vunpack.c.l.b16 %v87
  %v335 = vunpack.c.h.b16 %v87
  %v336 = vunpack.c.l.b16 %v88
  %v337 = vunpack.c.h.b16 %v88
  %v338 = vunpack.c.l.b16 %v89
  %v339 = vunpack.c.h.b16 %v89
  %v340 = vunpack.c.l.b16 %v90
  %v341 = vunpack.c.h.b16 %v90
  %v342 = vunpack.c.l.b16 %v91
  %v343 = vunpack.c.h.b16 %v91
  %v344 = vunpack.c.l.b16 %v92
  %v345 = vunpack.c.h.b16 %v92
  %v346 = vunpack.c.l.b16 %v93
  %v347 = vunpack.c.h.b16 %v93
  %v348 = vunpack.c.l.b16 %v94
  %v349 = vunpack.c.h.b16 %v94
  %v350 = vunpack.c.l.b16 %v95
  %v351 = vunpack.c.h.b16 %v95
  %v352 = vunpack.c.l.b16 %v96
  %v353 = vunpack.c.h.b16 %v96
  %v354 = vunpack.c.l.b16 %v97
  %v355 = vunpack.c.h.b16 %v97
  %v356 = vunpack.c.l.b16 %v98
  %v357 = vunpack.c.h.b16 %v98
  %v358 = vunpack.c.l.b16 %v99
  %v359 = vunpack.c.h.b16 %v99
  %v360 = vunpack.c.l.b16 %v100
  %v361 = vunpack.c.h.b16 %v100
  %v362 = vunpack.c.l.b16 %v101
  %v363 = vunpack.c.h.b16 %v101
  %v364 = vunpack.c.l.b16 %v102
  %v365 = vunpack.c.h.b16 %v102
  %v366 = vunpack.c.l.b16 %v103
  %v367 = vunpack.c.h.b16 %v103
  %v368 = vunpack.c.l.b16 %v104
  %v369 = vunpack.c.h.b16 %v104
  %v370 = vunpack.c.l.b16 %v105
  %v371 = vunpack.c.h.b16 %v105
  %v372 = vunpack.c.l.b16 %v106
  %v373 = vunpack.c.h.b16 %v106
  %v374 = vunpack.c.l.b16 %v107
  %v375 = vunpack.c.h.b16 %v107
  %v376 = vunpack.c.l.b16 %v108
  %v377 = vunpack.c.h.b16 %v108
  %v378 = vunpack.c.l.b16 %v109
  %v379 = vunpack.c.h.b16 %v109
  %v380 = vunpack.c.l.b16 %v110
  %v381 = vunpack.c.h.b16 %v110
  %v382 = vunpack.c.l.b16 %v111
  %v383 = vunpack.c.h.b16 %v111
  %v384 = vpack.c.b16 %v240, %v232
  %v385 = vpack.c.b16 %v241, %v233
  %v386 = vpack.c.b16 %v242, %v234
  %v387 = vpack.c.b16 %v243, %v235
  %v388 = vpack.c.b16 %v244, %v236
  %v389 = vpack.c.b16 %v245, %v237
  %v390 = vpack.c.b16 %v246, %v238
  %v391 = vpack.c.b16 %v247, %v239
  %v392 = vpack.c.b16 %v256, %v248
  %v393 = vpack.c.b16 %v257, %v249
  %v394 = vpack.c.b16 %v258, %v250
  %v395 = vpack.c.b16 %v259, %v251
  %v396 = vpack.c.b16 %v260, %v252
  %v397 = vpack.c.b16 %v261, %v253
  %v398 = vpack.c.b16 %v262, %v254
  %v399 = vpack.c.b16 %v263, %v255
  %v400 = vpack.c.b16 %v272, %v264
  %v401 = vpack.c.b16 %v273, %v265
  %v402 = vpack.c.b16 %v274, %v266
  %v403 = vpack.c.b16 %v275, %v267
  %v404 = vpack.c.b16 %v276, %v268
  %v405 = vpack.c.b16 %v277, %v269
  %v406 = vpack.c.b16 %v278, %v270
  %v407 = vpack.c.b16 %v279, %v271
  %v408 = vpack.c.b16 %v288, %v280
  %v409 = vpack.c.b16 %v289, %v281
  %v410 = vpack.c.b16 %v290, %v282
  %v411 = vpack.c.b16 %v291, %v283
  %v412 = vpack.c.b16 %v292, %v284
  %v413 = vpack.c.b16 %v293, %v285
  %v414 = vpack.c.b16 %v294, %v286
  %v415 = vpack.c.b16 %v295, %v287
  %v416 = vpack.c.b16 %v304, %v296
  %v417 = vpack.c.b16 %v305, %v297
  %v418 = vpack.c.b16 %v306, %v298
  %v419 = vpack.c.b16 %v307, %v299
  %v420 = vpack.c.b16 %v308, %v300
  %v421 = vpack.c.b16 %v309, %v301
  %v422 = vpack.c.b16 %v310, %v302
  %v423 = vpack.c.b16 %v311, %v303
  %v424 = vpack.c.b16 %v320, %v312
  %v425 = vpack.c.b16 %v321, %v313
  %v426 = vpack.c.b16 %v322, %v314
  %v427 = vpack.c.b16 %v323, %v315
  %v428 = vpack.c.b16 %v324, %v316
  %v429 = vpack.c.b16 %v325, %v317
  %v430 = vpack.c.b16 %v326, %v318
  %v431 = vpack.c.b16 %v327, %v319
  %v432 = vpack.c.b16 %v336, %v328
  %v433 = vpack.c.b16 %v337, %v329
  %v434 = vpack.c.b16 %v338, %v330
  %v435 = vpack.c.b16 %v339, %v331
  %v436 = vpack.c.b16 %v340, %v332
  %v437 = vpack.c.b16 %v341, %v333
  %v438 = vpack.c.b16 %v342, %v334
  %v439 = vpack.c.b16 %v343, %v335
  %v440 = vpack.c.b16 %v352, %v344
  %v441 = vpack.c.b16 %v353, %v345
  %v442 = vpack.c.b16 %v354, %v346
  %v443 = vpack.c.b16 %v355, %v347
  %v444 = vpack.c.b16 %v356, %v348
  %v445 = vpack.c.b16 %v357, %v349
  %v446 = vpack.c.b16 %v358, %v350
  %v447 = vpack.c.b16 %v359, %v351
  %v448 = vpack.c.b16 %v368, %v360
  %v449 = vpack.c.b16 %v369, %v361
  %v450 = vpack.c.b16 %v370, %v362
  %v451 = vpack.c.b16 %v371, %v363
  %v452 = vpack.c.b16 %v372, %v364
  %v453 = vpack.c.b16 %v373, %v365
  %v454 = vpack.c.b16 %v374, %v366
  %v455 = vpack.c.b16 %v375, %v367
  %v456 = vpack.c.b16 %v376, %v376
  %v457 = vpack.c.b16 %v377, %v377
  %v458 = vpack.c.b16 %v378, %v378
  %v459 = vpack.c.b16 %v379, %v379
  %v460 = vpack.c.b16 %v380, %v380
  %v461 = vpack.c.b16 %v381, %v381
  %v462 = vpack.c.b16 %v382, %v382
  %v463 = vpack.c.b16 %v383, %v383
  %vm536 = vcmask 195584
  %v538 = vsel %vm536, %v33, 0
  %v541 = vsel %vm536, %v35, 0
  %vm543 = vcmask 1043456
  %v545 = vsel %vm543, %v456, 0
  %v548 = vsel %vm543, %v457, 0
  %v551 = vsel %vm543, %v458, 0
  %v554 = vsel %vm543, %v459, 0
  %v557 = vsel %vm543, %v460, 0
  %v560 = vsel %vm543, %v461, 0
  %v563 = vsel %vm543, %v462, 0
  %v566 = vsel %vm543, %v463, 0
  %568 = vmatprep.subr.bf16.mxu0 %v385
  %569 = vmatpush1.bf16.msra.mxu0 %v384
  %570 = vmatprep.subr.bf16.mxu0 %v393
  %571 = vmatpush1.bf16.msra.mxu0 %v392
  %572 = vmatprep.subr.bf16.mxu0 %v401
  %573 = vmatpush1.bf16.msra.mxu0 %v400
  %574 = vmatprep.subr.bf16.mxu0 %v409
  %575 = vmatpush1.bf16.msra.mxu0 %v408
  %576 = vmatprep.subr.bf16.mxu0 %v417
  %577 = vmatpush1.bf16.msra.mxu0 %v416
  %578 = vmatprep.subr.bf16.mxu0 %v425
  %579 = vmatpush1.bf16.msra.mxu0 %v424
  %580 = vmatprep.subr.bf16.mxu0 %v433
  %581 = vmatpush1.bf16.msra.mxu0 %v432
  %582 = vmatprep.subr.bf16.mxu0 %v441
  %583 = vmatpush1.bf16.msra.mxu0 %v440
  %584 = vmatprep.subr.bf16.mxu0 %v449
  %585 = vmatpush1.bf16.msra.mxu0 %v448
  %586 = vmatprep.subr.bf16.mxu0 %v548
  %587 = vmatpush1.bf16.msra.mxu0 %v545
  %588 = vmatprep.subr.bf16.mxu0 0
  %589 = vmatpush1.bf16.msra.mxu0 0
  %590 = vmatprep.subr.bf16.mxu0 0
  %591 = vmatpush1.bf16.msra.mxu0 0
  %592 = vmatprep.subr.bf16.mxu0 0
  %593 = vmatpush1.bf16.msra.mxu0 0
  %594 = vmatprep.subr.bf16.mxu0 0
  %595 = vmatpush1.bf16.msra.mxu0 0
  %596 = vmatprep.subr.bf16.mxu0 0
  %597 = vmatpush1.bf16.msra.mxu0 0
  %598 = vmatprep.subr.bf16.mxu0 0
  %599 = vmatpush1.bf16.msra.mxu0 0
  %600 = vmatprep.mubr.bf16.mxu0 %v538
  %601 = vmatmul.mubr.bf16.gmra.mrb[0].mxu0 %v32
  %v602 = vpop.f32.mrb[0].mxu0
  %v603 = vadd.f32 %v127, %v602
  %v604 = vpop.f32.mrb[0].mxu0
  %v605 = vadd.f32 %v131, %v604
  %v606 = vpop.f32.mrb[0].mxu0
  %v607 = vadd.f32 %v127, %v606
  %v608 = vpop.f32.mrb[0].mxu0
  %v609 = vadd.f32 %v131, %v608
  %610 = vmatprep.mubr.bf16.mxu0 %v541
  %611 = vmatmul.mubr.bf16.gmra.mrb[0].mxu0 %v34
  %v612 = vpop.f32.mrb[0].mxu0
  %v613 = vadd.f32 %v127, %v612
  %v614 = vpop.f32.mrb[0].mxu0
  %v615 = vadd.f32 %v131, %v614
  %v616 = vpop.f32.mrb[0].mxu0
  %v617 = vadd.f32 %v127, %v616
  %v618 = vpop.f32.mrb[0].mxu0
  %v619 = vadd.f32 %v131, %v618
  %620 = vdwg.mxu0
  %621 = vmatprep.subr.bf16.mxu0 %v387
  %622 = vmatpush1.bf16.msra.mxu0 %v386
  %623 = vmatprep.subr.bf16.mxu0 %v395
  %624 = vmatpush1.bf16.msra.mxu0 %v394
  %625 = vmatprep.subr.bf16.mxu0 %v403
  %626 = vmatpush1.bf16.msra.mxu0 %v402
  %627 = vmatprep.subr.bf16.mxu0 %v411
  %628 = vmatpush1.bf16.msra.mxu0 %v410
  %629 = vmatprep.subr.bf16.mxu0 %v419
  %630 = vmatpush1.bf16.msra.mxu0 %v418
  %631 = vmatprep.subr.bf16.mxu0 %v427
  %632 = vmatpush1.bf16.msra.mxu0 %v426
  %633 = vmatprep.subr.bf16.mxu0 %v435
  %634 = vmatpush1.bf16.msra.mxu0 %v434
  %635 = vmatprep.subr.bf16.mxu0 %v443
  %636 = vmatpush1.bf16.msra.mxu0 %v442
  %637 = vmatprep.subr.bf16.mxu0 %v451
  %638 = vmatpush1.bf16.msra.mxu0 %v450
  %639 = vmatprep.subr.bf16.mxu0 %v554
  %640 = vmatpush1.bf16.msra.mxu0 %v551
  %641 = vmatprep.subr.bf16.mxu0 0
  %642 = vmatpush1.bf16.msra.mxu0 0
  %643 = vmatprep.subr.bf16.mxu0 0
  %644 = vmatpush1.bf16.msra.mxu0 0
  %645 = vmatprep.subr.bf16.mxu0 0
  %646 = vmatpush1.bf16.msra.mxu0 0
  %647 = vmatprep.subr.bf16.mxu0 0
  %648 = vmatpush1.bf16.msra.mxu0 0
  %649 = vmatprep.subr.bf16.mxu0 0
  %650 = vmatpush1.bf16.msra.mxu0 0
  %651 = vmatprep.subr.bf16.mxu0 0
  %652 = vmatpush1.bf16.msra.mxu0 0
  %653 = vmatprep.mubr.bf16.mxu0 %v538
  %654 = vmatmul.mubr.bf16.gmra.mrb[0].mxu0 %v32
  %v655 = vpop.f32.mrb[0].mxu0
  %v656 = vadd.f32 %v135, %v655
  %v657 = vpop.f32.mrb[0].mxu0
  %v658 = vadd.f32 %v139, %v657
  %v659 = vpop.f32.mrb[0].mxu0
  %v660 = vadd.f32 %v135, %v659
  %v661 = vpop.f32.mrb[0].mxu0
  %v662 = vadd.f32 %v139, %v661
  %663 = vmatprep.mubr.bf16.mxu0 %v541
  %664 = vmatmul.mubr.bf16.gmra.mrb[0].mxu0 %v34
  %v665 = vpop.f32.mrb[0].mxu0
  %v666 = vadd.f32 %v135, %v665
  %v667 = vpop.f32.mrb[0].mxu0
  %v668 = vadd.f32 %v139, %v667
  %v669 = vpop.f32.mrb[0].mxu0
  %v670 = vadd.f32 %v135, %v669
  %v671 = vpop.f32.mrb[0].mxu0
  %v672 = vadd.f32 %v139, %v671
  %673 = vdwg.mxu0
  %674 = vmatprep.subr.bf16.mxu0 %v389
  %675 = vmatpush1.bf16.msra.mxu0 %v388
  %676 = vmatprep.subr.bf16.mxu0 %v397
  %677 = vmatpush1.bf16.msra.mxu0 %v396
  %678 = vmatprep.subr.bf16.mxu0 %v405
  %679 = vmatpush1.bf16.msra.mxu0 %v404
  %680 = vmatprep.subr.bf16.mxu0 %v413
  %681 = vmatpush1.bf16.msra.mxu0 %v412
  %682 = vmatprep.subr.bf16.mxu0 %v421
  %683 = vmatpush1.bf16.msra.mxu0 %v420
  %684 = vmatprep.subr.bf16.mxu0 %v429
  %685 = vmatpush1.bf16.msra.mxu0 %v428
  %686 = vmatprep.subr.bf16.mxu0 %v437
  %687 = vmatpush1.bf16.msra.mxu0 %v436
  %688 = vmatprep.subr.bf16.mxu0 %v445
  %689 = vmatpush1.bf16.msra.mxu0 %v444
  %690 = vmatprep.subr.bf16.mxu0 %v453
  %691 = vmatpush1.bf16.msra.mxu0 %v452
  %692 = vmatprep.subr.bf16.mxu0 %v560
  %693 = vmatpush1.bf16.msra.mxu0 %v557
  %694 = vmatprep.subr.bf16.mxu0 0
  %695 = vmatpush1.bf16.msra.mxu0 0
  %696 = vmatprep.subr.bf16.mxu0 0
  %697 = vmatpush1.bf16.msra.mxu0 0
  %698 = vmatprep.subr.bf16.mxu0 0
  %699 = vmatpush1.bf16.msra.mxu0 0
  %700 = vmatprep.subr.bf16.mxu0 0
  %701 = vmatpush1.bf16.msra.mxu0 0
  %702 = vmatprep.subr.bf16.mxu0 0
  %703 = vmatpush1.bf16.msra.mxu0 0
  %704 = vmatprep.subr.bf16.mxu0 0
  %705 = vmatpush1.bf16.msra.mxu0 0
  %706 = vmatprep.mubr.bf16.mxu0 %v538
  %707 = vmatmul.mubr.bf16.gmra.mrb[0].mxu0 %v32
  %v708 = vpop.f32.mrb[0].mxu0
  %v709 = vadd.f32 %v143, %v708
  %v710 = vpop.f32.mrb[0].mxu0
  %v711 = vadd.f32 %v147, %v710
  %v712 = vpop.f32.mrb[0].mxu0
  %v713 = vadd.f32 %v143, %v712
  %v714 = vpop.f32.mrb[0].mxu0
  %v715 = vadd.f32 %v147, %v714
  %716 = vmatprep.mubr.bf16.mxu0 %v541
  %717 = vmatmul.mubr.bf16.gmra.mrb[0].mxu0 %v34
  %v718 = vpop.f32.mrb[0].mxu0
  %v719 = vadd.f32 %v143, %v718
  %v720 = vpop.f32.mrb[0].mxu0
  %v721 = vadd.f32 %v147, %v720
  %v722 = vpop.f32.mrb[0].mxu0
  %v723 = vadd.f32 %v143, %v722
  %v724 = vpop.f32.mrb[0].mxu0
  %v725 = vadd.f32 %v147, %v724
  %726 = vdwg.mxu0
  %727 = vmatprep.subr.bf16.mxu0 %v391
  %728 = vmatpush1.bf16.msra.mxu0 %v390
  %729 = vmatprep.subr.bf16.mxu0 %v399
  %730 = vmatpush1.bf16.msra.mxu0 %v398
  %731 = vmatprep.subr.bf16.mxu0 %v407
  %732 = vmatpush1.bf16.msra.mxu0 %v406
  %733 = vmatprep.subr.bf16.mxu0 %v415
  %734 = vmatpush1.bf16.msra.mxu0 %v414
  %735 = vmatprep.subr.bf16.mxu0 %v423
  %736 = vmatpush1.bf16.msra.mxu0 %v422
  %737 = vmatprep.subr.bf16.mxu0 %v431
  %738 = vmatpush1.bf16.msra.mxu0 %v430
  %739 = vmatprep.subr.bf16.mxu0 %v439
  %740 = vmatpush1.bf16.msra.mxu0 %v438
  %741 = vmatprep.subr.bf16.mxu0 %v447
  %742 = vmatpush1.bf16.msra.mxu0 %v446
  %743 = vmatprep.subr.bf16.mxu0 %v455
  %744 = vmatpush1.bf16.msra.mxu0 %v454
  %745 = vmatprep.subr.bf16.mxu0 %v566
  %746 = vmatpush1.bf16.msra.mxu0 %v563
  %747 = vmatprep.subr.bf16.mxu0 0
  %748 = vmatpush1.bf16.msra.mxu0 0
  %749 = vmatprep.subr.bf16.mxu0 0
  %750 = vmatpush1.bf16.msra.mxu0 0
  %751 = vmatprep.subr.bf16.mxu0 0
  %752 = vmatpush1.bf16.msra.mxu0 0
  %753 = vmatprep.subr.bf16.mxu0 0
  %754 = vmatpush1.bf16.msra.mxu0 0
  %755 = vmatprep.subr.bf16.mxu0 0
  %756 = vmatpush1.bf16.msra.mxu0 0
  %757 = vmatprep.subr.bf16.mxu0 0
  %758 = vmatpush1.bf16.msra.mxu0 0
  %759 = vmatprep.mubr.bf16.mxu0 %v538
  %760 = vmatmul.mubr.bf16.gmra.mrb[0].mxu0 %v32
  %v761 = vpop.f32.mrb[0].mxu0
  %v762 = vadd.f32 %v151, %v761
  %v763 = vpop.f32.mrb[0].mxu0
  %v764 = vadd.f32 %v155, %v763
  %v765 = vpop.f32.mrb[0].mxu0
  %v766 = vadd.f32 %v151, %v765
  %v767 = vpop.f32.mrb[0].mxu0
  %v768 = vadd.f32 %v155, %v767
  %769 = vmatprep.mubr.bf16.mxu0 %v541
  %770 = vmatmul.mubr.bf16.gmra.mrb[0].mxu0 %v34
  %v771 = vpop.f32.mrb[0].mxu0
  %v772 = vadd.f32 %v151, %v771
  %v773 = vpop.f32.mrb[0].mxu0
  %v774 = vadd.f32 %v155, %v773
  %v775 = vpop.f32.mrb[0].mxu0
  %v776 = vadd.f32 %v151, %v775
  %v777 = vpop.f32.mrb[0].mxu0
  %v778 = vadd.f32 %v155, %v777
  %779 = vdwg.mxu0
  %v780 = vmax.f32 %v603, 0.0
  %v781 = vmax.f32 %v605, 0.0
  %v782 = vmax.f32 %v656, 0.0
  %v783 = vmax.f32 %v658, 0.0
  %v784 = vmax.f32 %v709, 0.0
  %v785 = vmax.f32 %v711, 0.0
  %v786 = vmax.f32 %v762, 0.0
  %v787 = vmax.f32 %v764, 0.0
  %v788 = vmax.f32 %v607, 0.0
  %v789 = vmax.f32 %v609, 0.0
  %v790 = vmax.f32 %v660, 0.0
  %v791 = vmax.f32 %v662, 0.0
  %v792 = vmax.f32 %v713, 0.0
  %v793 = vmax.f32 %v715, 0.0
  %v794 = vmax.f32 %v766, 0.0
  %v795 = vmax.f32 %v768, 0.0
  %v796 = vmax.f32 %v613, 0.0
  %v797 = vmax.f32 %v615, 0.0
  %v798 = vmax.f32 %v666, 0.0
  %v799 = vmax.f32 %v668, 0.0
  %v800 = vmax.f32 %v719, 0.0
  %v801 = vmax.f32 %v721, 0.0
  %v802 = vmax.f32 %v772, 0.0
  %v803 = vmax.f32 %v774, 0.0
  %v804 = vmax.f32 %v617, 0.0
  %v805 = vmax.f32 %v619, 0.0
  %v806 = vmax.f32 %v670, 0.0
  %v807 = vmax.f32 %v672, 0.0
  %v808 = vmax.f32 %v723, 0.0
  %v809 = vmax.f32 %v725, 0.0
  %v810 = vmax.f32 %v776, 0.0
  %v811 = vmax.f32 %v778, 0.0
  %v812 = vmax.f32 %v780, %v782
  %v813 = vmax.f32 %v781, %v783
  %v814 = vmax.f32 %v788, %v790
  %v815 = vmax.f32 %v789, %v791
  %v816 = vmax.f32 %v796, %v798
  %v817 = vmax.f32 %v797, %v799
  %v818 = vmax.f32 %v804, %v806
  %v819 = vmax.f32 %v805, %v807
  %v820 = vmax.f32 %v784, %v786
  %v821 = vmax.f32 %v785, %v787
  %v822 = vmax.f32 %v792, %v794
  %v823 = vmax.f32 %v793, %v795
  %v824 = vmax.f32 %v800, %v802
  %v825 = vmax.f32 %v801, %v803
  %v826 = vmax.f32 %v808, %v810
  %v827 = vmax.f32 %v809, %v811
  %v828 = vmax.f32 %v812, %v820
  %v829 = vmax.f32 %v813, %v821
  %v830 = vmax.f32 %v814, %v822
  %v831 = vmax.f32 %v815, %v823
  %v832 = vmax.f32 %v816, %v824
  %v833 = vmax.f32 %v817, %v825
  %v834 = vmax.f32 %v818, %v826
  %v835 = vmax.f32 %v819, %v827
  %v836 = vld [vmem:[%s5] sm:$0xff]
  %v837 = vld [vmem:[%s5 + $0x8] sm:$0xff]
  %v838 = vld [vmem:[%s5 + $0x10] sm:$0xff]
  %v839 = vld [vmem:[%s5 + $0x18] sm:$0xff]
  %v840 = vld [vmem:[%s5 + $0x20] sm:$0xff]
  %v841 = vld [vmem:[%s5 + $0x28] sm:$0xff]
  %v842 = vld [vmem:[%s5 + $0x30] sm:$0xff]
  %v843 = vld [vmem:[%s5 + $0x38] sm:$0xff]
  %v844 = vld [vmem:[%s5 + $0x40] sm:$0xff]
  %v845 = vld [vmem:[%s5 + $0x48] sm:$0xff]
  %v846 = vld [vmem:[%s5 + $0x50] sm:$0xff]
  %v847 = vld [vmem:[%s5 + $0x58] sm:$0xff]
  %v848 = vld [vmem:[%s5 + $0x60] sm:$0xff]
  %v849 = vld [vmem:[%s5 + $0x68] sm:$0xff]
  %v850 = vld [vmem:[%s5 + $0x70] sm:$0xff]
  %v851 = vld [vmem:[%s5 + $0x78] sm:$0xff]
  %v852 = vld [vmem:[%s5 + $0x80] sm:$0xff]
  %v853 = vld [vmem:[%s5 + $0x88] sm:$0xff]
  %v854 = vld [vmem:[%s5 + $0x90] sm:$0xff]
  %v855 = vld [vmem:[%s5 + $0x98] sm:$0xff]
  %v856 = vld [vmem:[%s5 + $0xa0] sm:$0xff]
  %v857 = vld [vmem:[%s5 + $0xa8] sm:$0xff]
  %v858 = vld [vmem:[%s5 + $0xb0] sm:$0xff]
  %v859 = vld [vmem:[%s5 + $0xb8] sm:$0xff]
  %v860 = vld [vmem:[%s5 + $0xc0] sm:$0xff]
  %v861 = vld [vmem:[%s5 + $0xc8] sm:$0xff]
  %v862 = vld [vmem:[%s5 + $0xd0] sm:$0xff]
  %v863 = vld [vmem:[%s5 + $0xd8] sm:$0xff]
  %v864 = vld [vmem:[%s5 + $0xe0] sm:$0xff]
  %v865 = vld [vmem:[%s5 + $0xe8] sm:$0xff]
  %v866 = vld [vmem:[%s5 + $0xf0] sm:$0xff]
  %v867 = vld [vmem:[%s5 + $0xf8] sm:$0xff]
  %v868 = vld [vmem:[%s5 + $0x100] sm:$0x1]
  %v869 = vlaneseq
  %v870 = vshrl.u32 %v869, 7
  %v871 = vsub.s32 0, %v870
  %v872 = vrot.slane %v868, %v871
  %873 = vmatprep.subr.mxu0 0.0
  %874 = vmatpush1.msra.mxu0 %v836
  %875 = vmatprep.subr.mxu0 0.0
  %876 = vmatpush1.msra.mxu0 %v837
  %877 = vmatprep.subr.mxu0 0.0
  %878 = vmatpush1.msra.mxu0 %v838
  %879 = vmatprep.subr.mxu0 0.0
  %880 = vmatpush1.msra.mxu0 %v839
  %881 = vmatprep.subr.mxu0 0.0
  %882 = vmatpush1.msra.mxu0 %v840
  %883 = vmatprep.subr.mxu0 0.0
  %884 = vmatpush1.msra.mxu0 %v841
  %885 = vmatprep.subr.mxu0 0.0
  %886 = vmatpush1.msra.mxu0 %v842
  %887 = vmatprep.subr.mxu0 0.0
  %888 = vmatpush1.msra.mxu0 %v843
  %889 = vmatprep.subr.mxu0 0.0
  %890 = vmatpush1.msra.mxu0 %v844
  %891 = vmatprep.subr.mxu0 0.0
  %892 = vmatpush1.msra.mxu0 %v845
  %893 = vmatprep.subr.mxu0 0.0
  %894 = vmatpush1.msra.mxu0 %v846
  %895 = vmatprep.subr.mxu0 0.0
  %896 = vmatpush1.msra.mxu0 %v847
  %897 = vmatprep.subr.mxu0 0.0
  %898 = vmatpush1.msra.mxu0 %v848
  %899 = vmatprep.subr.mxu0 0.0
  %900 = vmatpush1.msra.mxu0 %v849
  %901 = vmatprep.subr.mxu0 0.0
  %902 = vmatpush1.msra.mxu0 %v850
  %903 = vmatprep.subr.mxu0 0.0
  %904 = vmatpush1.msra.mxu0 %v851
  %905 = vmatprep.subr.mxu0 0.0
  %906 = vmatpush1.msra.mxu0 %v852
  %907 = vmatprep.subr.mxu0 0.0
  %908 = vmatpush1.msra.mxu0 %v853
  %909 = vmatprep.subr.mxu0 0.0
  %910 = vmatpush1.msra.mxu0 %v854
  %911 = vmatprep.subr.mxu0 0.0
  %912 = vmatpush1.msra.mxu0 %v855
  %913 = vmatprep.subr.mxu0 0.0
  %914 = vmatpush1.msra.mxu0 %v856
  %915 = vmatprep.subr.mxu0 0.0
  %916 = vmatpush1.msra.mxu0 %v857
  %917 = vmatprep.subr.mxu0 0.0
  %918 = vmatpush1.msra.mxu0 %v858
  %919 = vmatprep.subr.mxu0 0.0
  %920 = vmatpush1.msra.mxu0 %v859
  %921 = vmatprep.subr.mxu0 0.0
  %922 = vmatpush1.msra.mxu0 %v860
  %923 = vmatprep.subr.mxu0 0.0
  %924 = vmatpush1.msra.mxu0 %v861
  %925 = vmatprep.subr.mxu0 0.0
  %926 = vmatpush1.msra.mxu0 %v862
  %927 = vmatprep.subr.mxu0 0.0
  %928 = vmatpush1.msra.mxu0 %v863
  %929 = vmatprep.subr.mxu0 0.0
  %930 = vmatpush1.msra.mxu0 %v864
  %931 = vmatprep.subr.mxu0 0.0
  %932 = vmatpush1.msra.mxu0 %v865
  %933 = vmatprep.subr.mxu0 0.0
  %934 = vmatpush1.msra.mxu0 %v866
  %935 = vmatprep.subr.mxu0 0.0
  %936 = vmatpush1.msra.mxu0 %v867
  %937 = vmatprep.mubr.f32.mxu0 %v829
  %938 = vmatmul.mubr.f32.gmra.mrb[0].mxu0 %v828
  %v939 = vpop.f32.mrb[0].mxu0
  %v940 = vadd.f32 %v872, %v939
  %v941 = vpop.f32.mrb[0].mxu0
  %942 = vmatprep.mubr.f32.mxu0 %v831
  %943 = vmatmul.mubr.f32.gmra.mrb[0].mxu0 %v830
  %v944 = vpop.f32.mrb[0].mxu0
  %v945 = vadd.f32 %v872, %v944
  %v946 = vpop.f32.mrb[0].mxu0
  %947 = vmatprep.mubr.f32.mxu0 %v833
  %948 = vmatmul.mubr.f32.gmra.mrb[0].mxu0 %v832
  %v949 = vpop.f32.mrb[0].mxu0
  %v950 = vadd.f32 %v872, %v949
  %v951 = vpop.f32.mrb[0].mxu0
  %952 = vmatprep.mubr.f32.mxu0 %v835
  %953 = vmatmul.mubr.f32.gmra.mrb[0].mxu0 %v834
  %v954 = vpop.f32.mrb[0].mxu0
  %v955 = vadd.f32 %v872, %v954
  %v956 = vpop.f32.mrb[0].mxu0
  %957 = vdwg.mxu0
  %v958 = vmax.f32 %v940, 0.0
  %v959 = vmax.f32 %v945, 0.0
  %v960 = vmax.f32 %v950, 0.0
  %v961 = vmax.f32 %v955, 0.0
  %v962 = vld [vmem:[%s4] sm:$0xff]
  %v963 = vld [vmem:[%s4 + $0x8] sm:$0xff]
  %v964 = vld [vmem:[%s4 + $0x10] sm:$0xff]
  %v965 = vld [vmem:[%s4 + $0x18] sm:$0xff]
  %v966 = vld [vmem:[%s4 + $0x20] sm:$0xff]
  %v967 = vld [vmem:[%s4 + $0x28] sm:$0xff]
  %v968 = vld [vmem:[%s4 + $0x30] sm:$0xff]
  %v969 = vld [vmem:[%s4 + $0x38] sm:$0xff]
  %v970 = vld [vmem:[%s4 + $0x40] sm:$0xff]
  %v971 = vld [vmem:[%s4 + $0x48] sm:$0xff]
  %v972 = vld [vmem:[%s4 + $0x50] sm:$0xff]
  %v973 = vld [vmem:[%s4 + $0x58] sm:$0xff]
  %v974 = vld [vmem:[%s4 + $0x60] sm:$0xff]
  %v975 = vld [vmem:[%s4 + $0x68] sm:$0xff]
  %v976 = vld [vmem:[%s4 + $0x70] sm:$0xff]
  %v977 = vld [vmem:[%s4 + $0x78] sm:$0xff]
  %v978 = vld [vmem:[%s4 + $0x80] sm:$0x1]
  %v979 = vlaneseq
  %v980 = vshrl.u32 %v979, 7
  %v981 = vsub.s32 0, %v980
  %v982 = vrot.slane %v978, %v981
  %983 = vmatprep.subr.mxu0 0.0
  %984 = vmatpush1.msra.mxu0 %v962
  %985 = vmatprep.subr.mxu0 0.0
  %986 = vmatpush1.msra.mxu0 %v963
  %987 = vmatprep.subr.mxu0 0.0
  %988 = vmatpush1.msra.mxu0 %v964
  %989 = vmatprep.subr.mxu0 0.0
  %990 = vmatpush1.msra.mxu0 %v965
  %991 = vmatprep.subr.mxu0 0.0
  %992 = vmatpush1.msra.mxu0 %v966
  %993 = vmatprep.subr.mxu0 0.0
  %994 = vmatpush1.msra.mxu0 %v967
  %995 = vmatprep.subr.mxu0 0.0
  %996 = vmatpush1.msra.mxu0 %v968
  %997 = vmatprep.subr.mxu0 0.0
  %998 = vmatpush1.msra.mxu0 %v969
  %999 = vmatprep.subr.mxu0 0.0
  %1000 = vmatpush1.msra.mxu0 %v970
  %1001 = vmatprep.subr.mxu0 0.0
  %1002 = vmatpush1.msra.mxu0 %v971
  %1003 = vmatprep.subr.mxu0 0.0
  %1004 = vmatpush1.msra.mxu0 %v972
  %1005 = vmatprep.subr.mxu0 0.0
  %1006 = vmatpush1.msra.mxu0 %v973
  %1007 = vmatprep.subr.mxu0 0.0
  %1008 = vmatpush1.msra.mxu0 %v974
  %1009 = vmatprep.subr.mxu0 0.0
  %1010 = vmatpush1.msra.mxu0 %v975
  %1011 = vmatprep.subr.mxu0 0.0
  %1012 = vmatpush1.msra.mxu0 %v976
  %1013 = vmatprep.subr.mxu0 0.0
  %1014 = vmatpush1.msra.mxu0 %v977
  %1015 = vmatprep.subr.mxu0 0.0
  %1016 = vmatpush1.msra.mxu0 0.0
  %1017 = vmatprep.subr.mxu0 0.0
  %1018 = vmatpush1.msra.mxu0 0.0
  %1019 = vmatprep.subr.mxu0 0.0
  %1020 = vmatpush1.msra.mxu0 0.0
  %1021 = vmatprep.subr.mxu0 0.0
  %1022 = vmatpush1.msra.mxu0 0.0
  %1023 = vmatprep.subr.mxu0 0.0
  %1024 = vmatpush1.msra.mxu0 0.0
  %1025 = vmatprep.subr.mxu0 0.0
  %1026 = vmatpush1.msra.mxu0 0.0
  %1027 = vmatprep.subr.mxu0 0.0
  %1028 = vmatpush1.msra.mxu0 0.0
  %1029 = vmatprep.subr.mxu0 0.0
  %1030 = vmatpush1.msra.mxu0 0.0
  %1031 = vmatprep.subr.mxu0 0.0
  %1032 = vmatpush1.msra.mxu0 0.0
  %1033 = vmatprep.subr.mxu0 0.0
  %1034 = vmatpush1.msra.mxu0 0.0
  %1035 = vmatprep.subr.mxu0 0.0
  %1036 = vmatpush1.msra.mxu0 0.0
  %1037 = vmatprep.subr.mxu0 0.0
  %1038 = vmatpush1.msra.mxu0 0.0
  %1039 = vmatprep.subr.mxu0 0.0
  %1040 = vmatpush1.msra.mxu0 0.0
  %1041 = vmatprep.subr.mxu0 0.0
  %1042 = vmatpush1.msra.mxu0 0.0
  %1043 = vmatprep.subr.mxu0 0.0
  %1044 = vmatpush1.msra.mxu0 0.0
  %1045 = vmatprep.subr.mxu0 0.0
  %1046 = vmatpush1.msra.mxu0 0.0
  %1047 = vmatprep.mubr.f32.mxu0 0.0
  %1048 = vmatmul.mubr.f32.gmra.mrb[0].mxu0 %v958
  %v1049 = vpop.f32.mrb[0].mxu0
  %v1050 = vadd.f32 %v982, %v1049
  %v1051 = vpop.f32.mrb[0].mxu0
  %1052 = vmatprep.mubr.f32.mxu0 0.0
  %1053 = vmatmul.mubr.f32.gmra.mrb[0].mxu0 %v959
  %v1054 = vpop.f32.mrb[0].mxu0
  %v1055 = vadd.f32 %v982, %v1054
  %v1056 = vpop.f32.mrb[0].mxu0
  %1057 = vmatprep.mubr.f32.mxu0 0.0
  %1058 = vmatmul.mubr.f32.gmra.mrb[0].mxu0 %v960
  %v1059 = vpop.f32.mrb[0].mxu0
  %v1060 = vadd.f32 %v982, %v1059
  %v1061 = vpop.f32.mrb[0].mxu0
  %1062 = vmatprep.mubr.f32.mxu0 0.0
  %1063 = vmatmul.mubr.f32.gmra.mrb[0].mxu0 %v961
  %v1064 = vpop.f32.mrb[0].mxu0
  %v1065 = vadd.f32 %v982, %v1064
  %v1066 = vpop.f32.mrb[0].mxu0
  %1067 = vdwg.mxu0
  %v1068 = vmax.f32 %v1050, 0.0
  %v1069 = vmax.f32 %v1055, 0.0
  %v1070 = vmax.f32 %v1060, 0.0
  %v1071 = vmax.f32 %v1065, 0.0
  %v1072 = vld [vmem:[%s1] sm:$0xff]
  %v1073 = vld [vmem:[%s1 + $0x8] sm:$0xff]
  %v1074 = vld [vmem:[%s1 + $0x10] sm:$0xff]
  %v1075 = vld [vmem:[%s1 + $0x18] sm:$0xff]
  %v1076 = vld [vmem:[%s2 + $0x280] sm:$0xff]
  %v1077 = vld [vmem:[%s2 + $0x288] sm:$0xff]
  %v1078 = vld [vmem:[%s2 + $0x290] sm:$0xff]
  %v1079 = vld [vmem:[%s2 + $0x298] sm:$0xff]
  %v1080 = vld [vmem:[%s2 + $0x2a0] sm:$0xff]
  %v1081 = vld [vmem:[%s2 + $0x2a8] sm:$0xff]
  %v1082 = vld [vmem:[%s2 + $0x2b0] sm:$0xff]
  %v1083 = vld [vmem:[%s2 + $0x2b8] sm:$0xff]
  %v1084 = vld [vmem:[%s2 + $0x2c0] sm:$0xff]
  %v1085 = vld [vmem:[%s2 + $0x2c8] sm:$0xff]
  %v1086 = vld [vmem:[%s2 + $0x2d0] sm:$0xff]
  %v1087 = vld [vmem:[%s2 + $0x2d8] sm:$0xff]
  %v1088 = vld [vmem:[%s2 + $0x2e0] sm:$0xff]
  %v1089 = vld [vmem:[%s2 + $0x2e8] sm:$0xff]
  %v1090 = vld [vmem:[%s2 + $0x2f0] sm:$0xff]
  %v1091 = vld [vmem:[%s2 + $0x2f8] sm:$0xff]
  %v1092 = vld [vmem:[%s2 + $0x300] sm:$0xff]
  %v1093 = vld [vmem:[%s2 + $0x308] sm:$0xff]
  %v1094 = vld [vmem:[%s2 + $0x310] sm:$0xff]
  %v1095 = vld [vmem:[%s2 + $0x318] sm:$0xff]
  %v1096 = vld [vmem:[%s2 + $0x320] sm:$0xff]
  %v1097 = vld [vmem:[%s2 + $0x328] sm:$0xff]
  %v1098 = vld [vmem:[%s2 + $0x330] sm:$0xff]
  %v1099 = vld [vmem:[%s2 + $0x338] sm:$0xff]
  %v1100 = vld [vmem:[%s2 + $0x340] sm:$0xff]
  %v1101 = vld [vmem:[%s2 + $0x348] sm:$0xff]
  %v1102 = vld [vmem:[%s2 + $0x350] sm:$0xff]
  %v1103 = vld [vmem:[%s2 + $0x358] sm:$0xff]
  %v1104 = vld [vmem:[%s2 + $0x360] sm:$0xff]
  %v1105 = vld [vmem:[%s2 + $0x368] sm:$0xff]
  %v1106 = vld [vmem:[%s2 + $0x370] sm:$0xff]
  %v1107 = vld [vmem:[%s2 + $0x378] sm:$0xff]
  %v1108 = vld [vmem:[%s2 + $0x380] sm:$0xff]
  %v1109 = vld [vmem:[%s2 + $0x388] sm:$0xff]
  %v1110 = vld [vmem:[%s2 + $0x390] sm:$0xff]
  %v1111 = vld [vmem:[%s2 + $0x398] sm:$0xff]
  %v1112 = vld [vmem:[%s2 + $0x3a0] sm:$0xff]
  %v1113 = vld [vmem:[%s2 + $0x3a8] sm:$0xff]
  %v1114 = vld [vmem:[%s2 + $0x3b0] sm:$0xff]
  %v1115 = vld [vmem:[%s2 + $0x3b8] sm:$0xff]
  %v1116 = vpack.c.bf16 %v1073, %v1072
  %v1117 = vpack.c.bf16 %v1075, %v1074
  %v1126 = vunpack.c.l.b16 %v1076
  %v1127 = vunpack.c.h.b16 %v1076
  %v1128 = vunpack.c.l.b16 %v1077
  %v1129 = vunpack.c.h.b16 %v1077
  %v1130 = vunpack.c.l.b16 %v1078
  %v1131 = vunpack.c.h.b16 %v1078
  %v1132 = vunpack.c.l.b16 %v1079
  %v1133 = vunpack.c.h.b16 %v1079
  %v1134 = vunpack.c.l.b16 %v1080
  %v1135 = vunpack.c.h.b16 %v1080
  %v1136 = vunpack.c.l.b16 %v1081
  %v1137 = vunpack.c.h.b16 %v1081
  %v1138 = vunpack.c.l.b16 %v1082
  %v1139 = vunpack.c.h.b16 %v1082
  %v1140 = vunpack.c.l.b16 %v1083
  %v1141 = vunpack.c.h.b16 %v1083
  %v1142 = vpack.c.b16 %v1134, %v1126
  %v1143 = vpack.c.b16 %v1135, %v1127
  %v1144 = vpack.c.b16 %v1136, %v1128
  %v1145 = vpack.c.b16 %v1137, %v1129
  %v1146 = vpack.c.b16 %v1138, %v1130
  %v1147 = vpack.c.b16 %v1139, %v1131
  %v1148 = vpack.c.b16 %v1140, %v1132
  %v1149 = vpack.c.b16 %v1141, %v1133
  %vm1158 = vcmask 130048
  %v1160 = vsel %vm1158, %v1116, 0
  %v1163 = vsel %vm1158, %v1117, 0
  %1165 = vmatprep.subr.bf16.mxu0 %v1143
  %1166 = vmatpush1.bf16.msra.mxu0 %v1142
  %1167 = vmatprep.subr.bf16.mxu0 0
  %1168 = vmatpush1.bf16.msra.mxu0 0
  %1169 = vmatprep.subr.bf16.mxu0 0
  %1170 = vmatpush1.bf16.msra.mxu0 0
  %1171 = vmatprep.subr.bf16.mxu0 0
  %1172 = vmatpush1.bf16.msra.mxu0 0
  %1173 = vmatprep.subr.bf16.mxu0 0
  %1174 = vmatpush1.bf16.msra.mxu0 0
  %1175 = vmatprep.subr.bf16.mxu0 0
  %1176 = vmatpush1.bf16.msra.mxu0 0
  %1177 = vmatprep.subr.bf16.mxu0 0
  %1178 = vmatpush1.bf16.msra.mxu0 0
  %1179 = vmatprep.subr.bf16.mxu0 0
  %1180 = vmatpush1.bf16.msra.mxu0 0
  %1181 = vmatprep.subr.bf16.mxu0 0
  %1182 = vmatpush1.bf16.msra.mxu0 0
  %1183 = vmatprep.subr.bf16.mxu0 0
  %1184 = vmatpush1.bf16.msra.mxu0 0
  %1185 = vmatprep.subr.bf16.mxu0 0
  %1186 = vmatpush1.bf16.msra.mxu0 0
  %1187 = vmatprep.subr.bf16.mxu0 0
  %1188 = vmatpush1.bf16.msra.mxu0 0
  %1189 = vmatprep.subr.bf16.mxu0 0
  %1190 = vmatpush1.bf16.msra.mxu0 0
  %1191 = vmatprep.subr.bf16.mxu0 0
  %1192 = vmatpush1.bf16.msra.mxu0 0
  %1193 = vmatprep.subr.bf16.mxu0 0
  %1194 = vmatpush1.bf16.msra.mxu0 0
  %1195 = vmatprep.subr.bf16.mxu0 0
  %1196 = vmatpush1.bf16.msra.mxu0 0
  %1197 = vmatprep.mubr.bf16.mxu0 0
  %1198 = vmatmul.mubr.bf16.gmra.mrb[0].mxu0 %v1160
  %v1199 = vpop.f32.mrb[0].mxu0
  %v1200 = vadd.f32 0.0, %v1199
  %v1201 = vpop.f32.mrb[0].mxu0
  %v1202 = vadd.f32 0.0, %v1201
  %v1203 = vpop.f32.mrb[0].mxu0
  %v1204 = vadd.f32 0.0, %v1203
  %v1205 = vpop.f32.mrb[0].mxu0
  %v1206 = vadd.f32 0.0, %v1205
  %1207 = vmatprep.mubr.bf16.mxu0 0
  %1208 = vmatmul.mubr.bf16.gmra.mrb[0].mxu0 %v1163
  %v1209 = vpop.f32.mrb[0].mxu0
  %v1210 = vadd.f32 0.0, %v1209
  %v1211 = vpop.f32.mrb[0].mxu0
  %v1212 = vadd.f32 0.0, %v1211
  %v1213 = vpop.f32.mrb[0].mxu0
  %v1214 = vadd.f32 0.0, %v1213
  %v1215 = vpop.f32.mrb[0].mxu0
  %v1216 = vadd.f32 0.0, %v1215
  %1217 = vdwg.mxu0
  %1218 = vmatprep.subr.bf16.mxu0 %v1145
  %1219 = vmatpush1.bf16.msra.mxu0 %v1144
  %1220 = vmatprep.subr.bf16.mxu0 0
  %1221 = vmatpush1.bf16.msra.mxu0 0
  %1222 = vmatprep.subr.bf16.mxu0 0
  %1223 = vmatpush1.bf16.msra.mxu0 0
  %1224 = vmatprep.subr.bf16.mxu0 0
  %1225 = vmatpush1.bf16.msra.mxu0 0
  %1226 = vmatprep.subr.bf16.mxu0 0
  %1227 = vmatpush1.bf16.msra.mxu0 0
  %1228 = vmatprep.subr.bf16.mxu0 0
  %1229 = vmatpush1.bf16.msra.mxu0 0
  %1230 = vmatprep.subr.bf16.mxu0 0
  %1231 = vmatpush1.bf16.msra.mxu0 0
  %1232 = vmatprep.subr.bf16.mxu0 0
  %1233 = vmatpush1.bf16.msra.mxu0 0
  %1234 = vmatprep.subr.bf16.mxu0 0
  %1235 = vmatpush1.bf16.msra.mxu0 0
  %1236 = vmatprep.subr.bf16.mxu0 0
  %1237 = vmatpush1.bf16.msra.mxu0 0
  %1238 = vmatprep.subr.bf16.mxu0 0
  %1239 = vmatpush1.bf16.msra.mxu0 0
  %1240 = vmatprep.subr.bf16.mxu0 0
  %1241 = vmatpush1.bf16.msra.mxu0 0
  %1242 = vmatprep.subr.bf16.mxu0 0
  %1243 = vmatpush1.bf16.msra.mxu0 0
  %1244 = vmatprep.subr.bf16.mxu0 0
  %1245 = vmatpush1.bf16.msra.mxu0 0
  %1246 = vmatprep.subr.bf16.mxu0 0
  %1247 = vmatpush1.bf16.msra.mxu0 0
  %1248 = vmatprep.subr.bf16.mxu0 0
  %1249 = vmatpush1.bf16.msra.mxu0 0
  %1250 = vmatprep.mubr.bf16.mxu0 0
  %1251 = vmatmul.mubr.bf16.gmra.mrb[0].mxu0 %v1160
  %v1252 = vpop.f32.mrb[0].mxu0
  %v1253 = vadd.f32 0.0, %v1252
  %v1254 = vpop.f32.mrb[0].mxu0
  %v1255 = vadd.f32 0.0, %v1254
  %v1256 = vpop.f32.mrb[0].mxu0
  %v1257 = vadd.f32 0.0, %v1256
  %v1258 = vpop.f32.mrb[0].mxu0
  %v1259 = vadd.f32 0.0, %v1258
  %1260 = vmatprep.mubr.bf16.mxu0 0
  %1261 = vmatmul.mubr.bf16.gmra.mrb[0].mxu0 %v1163
  %v1262 = vpop.f32.mrb[0].mxu0
  %v1263 = vadd.f32 0.0, %v1262
  %v1264 = vpop.f32.mrb[0].mxu0
  %v1265 = vadd.f32 0.0, %v1264
  %v1266 = vpop.f32.mrb[0].mxu0
  %v1267 = vadd.f32 0.0, %v1266
  %v1268 = vpop.f32.mrb[0].mxu0
  %v1269 = vadd.f32 0.0, %v1268
  %1270 = vdwg.mxu0
  %1271 = vmatprep.subr.bf16.mxu0 %v1147
  %1272 = vmatpush1.bf16.msra.mxu0 %v1146
  %1273 = vmatprep.subr.bf16.mxu0 0
  %1274 = vmatpush1.bf16.msra.mxu0 0
  %1275 = vmatprep.subr.bf16.mxu0 0
  %1276 = vmatpush1.bf16.msra.mxu0 0
  %1277 = vmatprep.subr.bf16.mxu0 0
  %1278 = vmatpush1.bf16.msra.mxu0 0
  %1279 = vmatprep.subr.bf16.mxu0 0
  %1280 = vmatpush1.bf16.msra.mxu0 0
  %1281 = vmatprep.subr.bf16.mxu0 0
  %1282 = vmatpush1.bf16.msra.mxu0 0
  %1283 = vmatprep.subr.bf16.mxu0 0
  %1284 = vmatpush1.bf16.msra.mxu0 0
  %1285 = vmatprep.subr.bf16.mxu0 0
  %1286 = vmatpush1.bf16.msra.mxu0 0
  %1287 = vmatprep.subr.bf16.mxu0 0
  %1288 = vmatpush1.bf16.msra.mxu0 0
  %1289 = vmatprep.subr.bf16.mxu0 0
  %1290 = vmatpush1.bf16.msra.mxu0 0
  %1291 = vmatprep.subr.bf16.mxu0 0
  %1292 = vmatpush1.bf16.msra.mxu0 0
  %1293 = vmatprep.subr.bf16.mxu0 0
  %1294 = vmatpush1.bf16.msra.mxu0 0
  %1295 = vmatprep.subr.bf16.mxu0 0
  %1296 = vmatpush1.bf16.msra.mxu0 0
  %1297 = vmatprep.subr.bf16.mxu0 0
  %1298 = vmatpush1.bf16.msra.mxu0 0
  %1299 = vmatprep.subr.bf16.mxu0 0
  %1300 = vmatpush1.bf16.msra.mxu0 0
  %1301 = vmatprep.subr.bf16.mxu0 0
  %1302 = vmatpush1.bf16.msra.mxu0 0
  %1303 = vmatprep.mubr.bf16.mxu0 0
  %1304 = vmatmul.mubr.bf16.gmra.mrb[0].mxu0 %v1160
  %v1305 = vpop.f32.mrb[0].mxu0
  %v1306 = vadd.f32 0.0, %v1305
  %v1307 = vpop.f32.mrb[0].mxu0
  %v1308 = vadd.f32 0.0, %v1307
  %v1309 = vpop.f32.mrb[0].mxu0
  %v1310 = vadd.f32 0.0, %v1309
  %v1311 = vpop.f32.mrb[0].mxu0
  %v1312 = vadd.f32 0.0, %v1311
  %1313 = vmatprep.mubr.bf16.mxu0 0
  %1314 = vmatmul.mubr.bf16.gmra.mrb[0].mxu0 %v1163
  %v1315 = vpop.f32.mrb[0].mxu0
  %v1316 = vadd.f32 0.0, %v1315
  %v1317 = vpop.f32.mrb[0].mxu0
  %v1318 = vadd.f32 0.0, %v1317
  %v1319 = vpop.f32.mrb[0].mxu0
  %v1320 = vadd.f32 0.0, %v1319
  %v1321 = vpop.f32.mrb[0].mxu0
  %v1322 = vadd.f32 0.0, %v1321
  %1323 = vdwg.mxu0
  %1324 = vmatprep.subr.bf16.mxu0 %v1149
  %1325 = vmatpush1.bf16.msra.mxu0 %v1148
  %1326 = vmatprep.subr.bf16.mxu0 0
  %1327 = vmatpush1.bf16.msra.mxu0 0
  %1328 = vmatprep.subr.bf16.mxu0 0
  %1329 = vmatpush1.bf16.msra.mxu0 0
  %1330 = vmatprep.subr.bf16.mxu0 0
  %1331 = vmatpush1.bf16.msra.mxu0 0
  %1332 = vmatprep.subr.bf16.mxu0 0
  %1333 = vmatpush1.bf16.msra.mxu0 0
  %1334 = vmatprep.subr.bf16.mxu0 0
  %1335 = vmatpush1.bf16.msra.mxu0 0
  %1336 = vmatprep.subr.bf16.mxu0 0
  %1337 = vmatpush1.bf16.msra.mxu0 0
  %1338 = vmatprep.subr.bf16.mxu0 0
  %1339 = vmatpush1.bf16.msra.mxu0 0
  %1340 = vmatprep.subr.bf16.mxu0 0
  %1341 = vmatpush1.bf16.msra.mxu0 0
  %1342 = vmatprep.subr.bf16.mxu0 0
  %1343 = vmatpush1.bf16.msra.mxu0 0
  %1344 = vmatprep.subr.bf16.mxu0 0
  %1345 = vmatpush1.bf16.msra.mxu0 0
  %1346 = vmatprep.subr.bf16.mxu0 0
  %1347 = vmatpush1.bf16.msra.mxu0 0
  %1348 = vmatprep.subr.bf16.mxu0 0
  %1349 = vmatpush1.bf16.msra.mxu0 0
  %1350 = vmatprep.subr.bf16.mxu0 0
  %1351 = vmatpush1.bf16.msra.mxu0 0
  %1352 = vmatprep.subr.bf16.mxu0 0
  %1353 = vmatpush1.bf16.msra.mxu0 0
  %1354 = vmatprep.subr.bf16.mxu0 0
  %1355 = vmatpush1.bf16.msra.mxu0 0
  %1356 = vmatprep.mubr.bf16.mxu0 0
  %1357 = vmatmul.mubr.bf16.gmra.mrb[0].mxu0 %v1160
  %v1358 = vpop.f32.mrb[0].mxu0
  %v1359 = vadd.f32 0.0, %v1358
  %v1360 = vpop.f32.mrb[0].mxu0
  %v1361 = vadd.f32 0.0, %v1360
  %v1362 = vpop.f32.mrb[0].mxu0
  %v1363 = vadd.f32 0.0, %v1362
  %v1364 = vpop.f32.mrb[0].mxu0
  %v1365 = vadd.f32 0.0, %v1364
  %1366 = vmatprep.mubr.bf16.mxu0 0
  %1367 = vmatmul.mubr.bf16.gmra.mrb[0].mxu0 %v1163
  %v1368 = vpop.f32.mrb[0].mxu0
  %v1369 = vadd.f32 0.0, %v1368
  %v1370 = vpop.f32.mrb[0].mxu0
  %v1371 = vadd.f32 0.0, %v1370
  %v1372 = vpop.f32.mrb[0].mxu0
  %v1373 = vadd.f32 0.0, %v1372
  %v1374 = vpop.f32.mrb[0].mxu0
  %v1375 = vadd.f32 0.0, %v1374
  %1376 = vdwg.mxu0
  %v1377 = vpack.c.bf16 %v1069, %v1068
  %v1378 = vpack.c.bf16 %v1071, %v1070
  %v1411 = vunpack.c.l.b16 %v1084
  %v1412 = vunpack.c.h.b16 %v1084
  %v1413 = vunpack.c.l.b16 %v1085
  %v1414 = vunpack.c.h.b16 %v1085
  %v1415 = vunpack.c.l.b16 %v1086
  %v1416 = vunpack.c.h.b16 %v1086
  %v1417 = vunpack.c.l.b16 %v1087
  %v1418 = vunpack.c.h.b16 %v1087
  %v1419 = vunpack.c.l.b16 %v1088
  %v1420 = vunpack.c.h.b16 %v1088
  %v1421 = vunpack.c.l.b16 %v1089
  %v1422 = vunpack.c.h.b16 %v1089
  %v1423 = vunpack.c.l.b16 %v1090
  %v1424 = vunpack.c.h.b16 %v1090
  %v1425 = vunpack.c.l.b16 %v1091
  %v1426 = vunpack.c.h.b16 %v1091
  %v1427 = vunpack.c.l.b16 %v1092
  %v1428 = vunpack.c.h.b16 %v1092
  %v1429 = vunpack.c.l.b16 %v1093
  %v1430 = vunpack.c.h.b16 %v1093
  %v1431 = vunpack.c.l.b16 %v1094
  %v1432 = vunpack.c.h.b16 %v1094
  %v1433 = vunpack.c.l.b16 %v1095
  %v1434 = vunpack.c.h.b16 %v1095
  %v1435 = vunpack.c.l.b16 %v1096
  %v1436 = vunpack.c.h.b16 %v1096
  %v1437 = vunpack.c.l.b16 %v1097
  %v1438 = vunpack.c.h.b16 %v1097
  %v1439 = vunpack.c.l.b16 %v1098
  %v1440 = vunpack.c.h.b16 %v1098
  %v1441 = vunpack.c.l.b16 %v1099
  %v1442 = vunpack.c.h.b16 %v1099
  %v1443 = vunpack.c.l.b16 %v1100
  %v1444 = vunpack.c.h.b16 %v1100
  %v1445 = vunpack.c.l.b16 %v1101
  %v1446 = vunpack.c.h.b16 %v1101
  %v1447 = vunpack.c.l.b16 %v1102
  %v1448 = vunpack.c.h.b16 %v1102
  %v1449 = vunpack.c.l.b16 %v1103
  %v1450 = vunpack.c.h.b16 %v1103
  %v1451 = vunpack.c.l.b16 %v1104
  %v1452 = vunpack.c.h.b16 %v1104
  %v1453 = vunpack.c.l.b16 %v1105
  %v1454 = vunpack.c.h.b16 %v1105
  %v1455 = vunpack.c.l.b16 %v1106
  %v1456 = vunpack.c.h.b16 %v1106
  %v1457 = vunpack.c.l.b16 %v1107
  %v1458 = vunpack.c.h.b16 %v1107
  %v1459 = vunpack.c.l.b16 %v1108
  %v1460 = vunpack.c.h.b16 %v1108
  %v1461 = vunpack.c.l.b16 %v1109
  %v1462 = vunpack.c.h.b16 %v1109
  %v1463 = vunpack.c.l.b16 %v1110
  %v1464 = vunpack.c.h.b16 %v1110
  %v1465 = vunpack.c.l.b16 %v1111
  %v1466 = vunpack.c.h.b16 %v1111
  %v1467 = vunpack.c.l.b16 %v1112
  %v1468 = vunpack.c.h.b16 %v1112
  %v1469 = vunpack.c.l.b16 %v1113
  %v1470 = vunpack.c.h.b16 %v1113
  %v1471 = vunpack.c.l.b16 %v1114
  %v1472 = vunpack.c.h.b16 %v1114
  %v1473 = vunpack.c.l.b16 %v1115
  %v1474 = vunpack.c.h.b16 %v1115
  %v1475 = vpack.c.b16 %v1419, %v1411
  %v1476 = vpack.c.b16 %v1420, %v1412
  %v1477 = vpack.c.b16 %v1421, %v1413
  %v1478 = vpack.c.b16 %v1422, %v1414
  %v1479 = vpack.c.b16 %v1423, %v1415
  %v1480 = vpack.c.b16 %v1424, %v1416
  %v1481 = vpack.c.b16 %v1425, %v1417
  %v1482 = vpack.c.b16 %v1426, %v1418
  %v1483 = vpack.c.b16 %v1435, %v1427
  %v1484 = vpack.c.b16 %v1436, %v1428
  %v1485 = vpack.c.b16 %v1437, %v1429
  %v1486 = vpack.c.b16 %v1438, %v1430
  %v1487 = vpack.c.b16 %v1439, %v1431
  %v1488 = vpack.c.b16 %v1440, %v1432
  %v1489 = vpack.c.b16 %v1441, %v1433
  %v1490 = vpack.c.b16 %v1442, %v1434
  %v1491 = vpack.c.b16 %v1451, %v1443
  %v1492 = vpack.c.b16 %v1452, %v1444
  %v1493 = vpack.c.b16 %v1453, %v1445
  %v1494 = vpack.c.b16 %v1454, %v1446
  %v1495 = vpack.c.b16 %v1455, %v1447
  %v1496 = vpack.c.b16 %v1456, %v1448
  %v1497 = vpack.c.b16 %v1457, %v1449
  %v1498 = vpack.c.b16 %v1458, %v1450
  %v1499 = vpack.c.b16 %v1467, %v1459
  %v1500 = vpack.c.b16 %v1468, %v1460
  %v1501 = vpack.c.b16 %v1469, %v1461
  %v1502 = vpack.c.b16 %v1470, %v1462
  %v1503 = vpack.c.b16 %v1471, %v1463
  %v1504 = vpack.c.b16 %v1472, %v1464
  %v1505 = vpack.c.b16 %v1473, %v1465
  %v1506 = vpack.c.b16 %v1474, %v1466
  %vm1539 = vcmask 523264
  %v1541 = vsel %vm1539, %v1377, 0
  %v1544 = vsel %vm1539, %v1378, 0
  %1546 = vmatprep.subr.bf16.mxu0 %v1476
  %1547 = vmatpush1.bf16.msra.mxu0 %v1475
  %1548 = vmatprep.subr.bf16.mxu0 %v1484
  %1549 = vmatpush1.bf16.msra.mxu0 %v1483
  %1550 = vmatprep.subr.bf16.mxu0 %v1492
  %1551 = vmatpush1.bf16.msra.mxu0 %v1491
  %1552 = vmatprep.subr.bf16.mxu0 %v1500
  %1553 = vmatpush1.bf16.msra.mxu0 %v1499
  %1554 = vmatprep.subr.bf16.mxu0 0
  %1555 = vmatpush1.bf16.msra.mxu0 0
  %1556 = vmatprep.subr.bf16.mxu0 0
  %1557 = vmatpush1.bf16.msra.mxu0 0
  %1558 = vmatprep.subr.bf16.mxu0 0
  %1559 = vmatpush1.bf16.msra.mxu0 0
  %1560 = vmatprep.subr.bf16.mxu0 0
  %1561 = vmatpush1.bf16.msra.mxu0 0
  %1562 = vmatprep.subr.bf16.mxu0 0
  %1563 = vmatpush1.bf16.msra.mxu0 0
  %1564 = vmatprep.subr.bf16.mxu0 0
  %1565 = vmatpush1.bf16.msra.mxu0 0
  %1566 = vmatprep.subr.bf16.mxu0 0
  %1567 = vmatpush1.bf16.msra.mxu0 0
  %1568 = vmatprep.subr.bf16.mxu0 0
  %1569 = vmatpush1.bf16.msra.mxu0 0
  %1570 = vmatprep.subr.bf16.mxu0 0
  %1571 = vmatpush1.bf16.msra.mxu0 0
  %1572 = vmatprep.subr.bf16.mxu0 0
  %1573 = vmatpush1.bf16.msra.mxu0 0
  %1574 = vmatprep.subr.bf16.mxu0 0
  %1575 = vmatpush1.bf16.msra.mxu0 0
  %1576 = vmatprep.subr.bf16.mxu0 0
  %1577 = vmatpush1.bf16.msra.mxu0 0
  %1578 = vmatprep.mubr.bf16.mxu0 0
  %1579 = vmatmul.mubr.bf16.gmra.mrb[0].mxu0 %v1541
  %v1580 = vpop.f32.mrb[0].mxu0
  %v1581 = vadd.f32 0.0, %v1580
  %v1582 = vpop.f32.mrb[0].mxu0
  %v1583 = vadd.f32 0.0, %v1582
  %v1584 = vpop.f32.mrb[0].mxu0
  %v1585 = vadd.f32 0.0, %v1584
  %v1586 = vpop.f32.mrb[0].mxu0
  %v1587 = vadd.f32 0.0, %v1586
  %1588 = vmatprep.mubr.bf16.mxu0 0
  %1589 = vmatmul.mubr.bf16.gmra.mrb[0].mxu0 %v1544
  %v1590 = vpop.f32.mrb[0].mxu0
  %v1591 = vadd.f32 0.0, %v1590
  %v1592 = vpop.f32.mrb[0].mxu0
  %v1593 = vadd.f32 0.0, %v1592
  %v1594 = vpop.f32.mrb[0].mxu0
  %v1595 = vadd.f32 0.0, %v1594
  %v1596 = vpop.f32.mrb[0].mxu0
  %v1597 = vadd.f32 0.0, %v1596
  %1598 = vdwg.mxu0
  %1599 = vmatprep.subr.bf16.mxu0 %v1478
  %1600 = vmatpush1.bf16.msra.mxu0 %v1477
  %1601 = vmatprep.subr.bf16.mxu0 %v1486
  %1602 = vmatpush1.bf16.msra.mxu0 %v1485
  %1603 = vmatprep.subr.bf16.mxu0 %v1494
  %1604 = vmatpush1.bf16.msra.mxu0 %v1493
  %1605 = vmatprep.subr.bf16.mxu0 %v1502
  %1606 = vmatpush1.bf16.msra.mxu0 %v1501
  %1607 = vmatprep.subr.bf16.mxu0 0
  %1608 = vmatpush1.bf16.msra.mxu0 0
  %1609 = vmatprep.subr.bf16.mxu0 0
  %1610 = vmatpush1.bf16.msra.mxu0 0
  %1611 = vmatprep.subr.bf16.mxu0 0
  %1612 = vmatpush1.bf16.msra.mxu0 0
  %1613 = vmatprep.subr.bf16.mxu0 0
  %1614 = vmatpush1.bf16.msra.mxu0 0
  %1615 = vmatprep.subr.bf16.mxu0 0
  %1616 = vmatpush1.bf16.msra.mxu0 0
  %1617 = vmatprep.subr.bf16.mxu0 0
  %1618 = vmatpush1.bf16.msra.mxu0 0
  %1619 = vmatprep.subr.bf16.mxu0 0
  %1620 = vmatpush1.bf16.msra.mxu0 0
  %1621 = vmatprep.subr.bf16.mxu0 0
  %1622 = vmatpush1.bf16.msra.mxu0 0
  %1623 = vmatprep.subr.bf16.mxu0 0
  %1624 = vmatpush1.bf16.msra.mxu0 0
  %1625 = vmatprep.subr.bf16.mxu0 0
  %1626 = vmatpush1.bf16.msra.mxu0 0
  %1627 = vmatprep.subr.bf16.mxu0 0
  %1628 = vmatpush1.bf16.msra.mxu0 0
  %1629 = vmatprep.subr.bf16.mxu0 0
  %1630 = vmatpush1.bf16.msra.mxu0 0
  %1631 = vmatprep.mubr.bf16.mxu0 0
  %1632 = vmatmul.mubr.bf16.gmra.mrb[0].mxu0 %v1541
  %v1633 = vpop.f32.mrb[0].mxu0
  %v1634 = vadd.f32 0.0, %v1633
  %v1635 = vpop.f32.mrb[0].mxu0
  %v1636 = vadd.f32 0.0, %v1635
  %v1637 = vpop.f32.mrb[0].mxu0
  %v1638 = vadd.f32 0.0, %v1637
  %v1639 = vpop.f32.mrb[0].mxu0
  %v1640 = vadd.f32 0.0, %v1639
  %1641 = vmatprep.mubr.bf16.mxu0 0
  %1642 = vmatmul.mubr.bf16.gmra.mrb[0].mxu0 %v1544
  %v1643 = vpop.f32.mrb[0].mxu0
  %v1644 = vadd.f32 0.0, %v1643
  %v1645 = vpop.f32.mrb[0].mxu0
  %v1646 = vadd.f32 0.0, %v1645
  %v1647 = vpop.f32.mrb[0].mxu0
  %v1648 = vadd.f32 0.0, %v1647
  %v1649 = vpop.f32.mrb[0].mxu0
  %v1650 = vadd.f32 0.0, %v1649
  %1651 = vdwg.mxu0
  %1652 = vmatprep.subr.bf16.mxu0 %v1480
  %1653 = vmatpush1.bf16.msra.mxu0 %v1479
  %1654 = vmatprep.subr.bf16.mxu0 %v1488
  %1655 = vmatpush1.bf16.msra.mxu0 %v1487
  %1656 = vmatprep.subr.bf16.mxu0 %v1496
  %1657 = vmatpush1.bf16.msra.mxu0 %v1495
  %1658 = vmatprep.subr.bf16.mxu0 %v1504
  %1659 = vmatpush1.bf16.msra.mxu0 %v1503
  %1660 = vmatprep.subr.bf16.mxu0 0
  %1661 = vmatpush1.bf16.msra.mxu0 0
  %1662 = vmatprep.subr.bf16.mxu0 0
  %1663 = vmatpush1.bf16.msra.mxu0 0
  %1664 = vmatprep.subr.bf16.mxu0 0
  %1665 = vmatpush1.bf16.msra.mxu0 0
  %1666 = vmatprep.subr.bf16.mxu0 0
  %1667 = vmatpush1.bf16.msra.mxu0 0
  %1668 = vmatprep.subr.bf16.mxu0 0
  %1669 = vmatpush1.bf16.msra.mxu0 0
  %1670 = vmatprep.subr.bf16.mxu0 0
  %1671 = vmatpush1.bf16.msra.mxu0 0
  %1672 = vmatprep.subr.bf16.mxu0 0
  %1673 = vmatpush1.bf16.msra.mxu0 0
  %1674 = vmatprep.subr.bf16.mxu0 0
  %1675 = vmatpush1.bf16.msra.mxu0 0
  %1676 = vmatprep.subr.bf16.mxu0 0
  %1677 = vmatpush1.bf16.msra.mxu0 0
  %1678 = vmatprep.subr.bf16.mxu0 0
  %1679 = vmatpush1.bf16.msra.mxu0 0
  %1680 = vmatprep.subr.bf16.mxu0 0
  %1681 = vmatpush1.bf16.msra.mxu0 0
  %1682 = vmatprep.subr.bf16.mxu0 0
  %1683 = vmatpush1.bf16.msra.mxu0 0
  %1684 = vmatprep.mubr.bf16.mxu0 0
  %1685 = vmatmul.mubr.bf16.gmra.mrb[0].mxu0 %v1541
  %v1686 = vpop.f32.mrb[0].mxu0
  %v1687 = vadd.f32 0.0, %v1686
  %v1688 = vpop.f32.mrb[0].mxu0
  %v1689 = vadd.f32 0.0, %v1688
  %v1690 = vpop.f32.mrb[0].mxu0
  %v1691 = vadd.f32 0.0, %v1690
  %v1692 = vpop.f32.mrb[0].mxu0
  %v1693 = vadd.f32 0.0, %v1692
  %1694 = vmatprep.mubr.bf16.mxu0 0
  %1695 = vmatmul.mubr.bf16.gmra.mrb[0].mxu0 %v1544
  %v1696 = vpop.f32.mrb[0].mxu0
  %v1697 = vadd.f32 0.0, %v1696
  %v1698 = vpop.f32.mrb[0].mxu0
  %v1699 = vadd.f32 0.0, %v1698
  %v1700 = vpop.f32.mrb[0].mxu0
  %v1701 = vadd.f32 0.0, %v1700
  %v1702 = vpop.f32.mrb[0].mxu0
  %v1703 = vadd.f32 0.0, %v1702
  %1704 = vdwg.mxu0
  %1705 = vmatprep.subr.bf16.mxu0 %v1482
  %1706 = vmatpush1.bf16.msra.mxu0 %v1481
  %1707 = vmatprep.subr.bf16.mxu0 %v1490
  %1708 = vmatpush1.bf16.msra.mxu0 %v1489
  %1709 = vmatprep.subr.bf16.mxu0 %v1498
  %1710 = vmatpush1.bf16.msra.mxu0 %v1497
  %1711 = vmatprep.subr.bf16.mxu0 %v1506
  %1712 = vmatpush1.bf16.msra.mxu0 %v1505
  %1713 = vmatprep.subr.bf16.mxu0 0
  %1714 = vmatpush1.bf16.msra.mxu0 0
  %1715 = vmatprep.subr.bf16.mxu0 0
  %1716 = vmatpush1.bf16.msra.mxu0 0
  %1717 = vmatprep.subr.bf16.mxu0 0
  %1718 = vmatpush1.bf16.msra.mxu0 0
  %1719 = vmatprep.subr.bf16.mxu0 0
  %1720 = vmatpush1.bf16.msra.mxu0 0
  %1721 = vmatprep.subr.bf16.mxu0 0
  %1722 = vmatpush1.bf16.msra.mxu0 0
  %1723 = vmatprep.subr.bf16.mxu0 0
  %1724 = vmatpush1.bf16.msra.mxu0 0
  %1725 = vmatprep.subr.bf16.mxu0 0
  %1726 = vmatpush1.bf16.msra.mxu0 0
  %1727 = vmatprep.subr.bf16.mxu0 0
  %1728 = vmatpush1.bf16.msra.mxu0 0
  %1729 = vmatprep.subr.bf16.mxu0 0
  %1730 = vmatpush1.bf16.msra.mxu0 0
  %1731 = vmatprep.subr.bf16.mxu0 0
  %1732 = vmatpush1.bf16.msra.mxu0 0
  %1733 = vmatprep.subr.bf16.mxu0 0
  %1734 = vmatpush1.bf16.msra.mxu0 0
  %1735 = vmatprep.subr.bf16.mxu0 0
  %1736 = vmatpush1.bf16.msra.mxu0 0
  %1737 = vmatprep.mubr.bf16.mxu0 0
  %1738 = vmatmul.mubr.bf16.gmra.mrb[0].mxu0 %v1541
  %v1739 = vpop.f32.mrb[0].mxu0
  %v1740 = vadd.f32 0.0, %v1739
  %v1741 = vpop.f32.mrb[0].mxu0
  %v1742 = vadd.f32 0.0, %v1741
  %v1743 = vpop.f32.mrb[0].mxu0
  %v1744 = vadd.f32 0.0, %v1743
  %v1745 = vpop.f32.mrb[0].mxu0
  %v1746 = vadd.f32 0.0, %v1745
  %1747 = vmatprep.mubr.bf16.mxu0 0
  %1748 = vmatmul.mubr.bf16.gmra.mrb[0].mxu0 %v1544
  %v1749 = vpop.f32.mrb[0].mxu0
  %v1750 = vadd.f32 0.0, %v1749
  %v1751 = vpop.f32.mrb[0].mxu0
  %v1752 = vadd.f32 0.0, %v1751
  %v1753 = vpop.f32.mrb[0].mxu0
  %v1754 = vadd.f32 0.0, %v1753
  %v1755 = vpop.f32.mrb[0].mxu0
  %v1756 = vadd.f32 0.0, %v1755
  %1757 = vdwg.mxu0
  %v1758 = vmul.f32 %v1200, %v1581
  %v1759 = vmul.f32 %v1202, %v1583
  %v1760 = vmul.f32 %v1253, %v1634
  %v1761 = vmul.f32 %v1255, %v1636
  %v1762 = vmul.f32 %v1306, %v1687
  %v1763 = vmul.f32 %v1308, %v1689
  %v1764 = vmul.f32 %v1359, %v1740
  %v1765 = vmul.f32 %v1361, %v1742
  %v1766 = vmul.f32 %v1204, %v1585
  %v1767 = vmul.f32 %v1206, %v1587
  %v1768 = vmul.f32 %v1257, %v1638
  %v1769 = vmul.f32 %v1259, %v1640
  %v1770 = vmul.f32 %v1310, %v1691
  %v1771 = vmul.f32 %v1312, %v1693
  %v1772 = vmul.f32 %v1363, %v1744
  %v1773 = vmul.f32 %v1365, %v1746
  %v1774 = vmul.f32 %v1210, %v1591
  %v1775 = vmul.f32 %v1212, %v1593
  %v1776 = vmul.f32 %v1263, %v1644
  %v1777 = vmul.f32 %v1265, %v1646
  %v1778 = vmul.f32 %v1316, %v1697
  %v1779 = vmul.f32 %v1318, %v1699
  %v1780 = vmul.f32 %v1369, %v1750
  %v1781 = vmul.f32 %v1371, %v1752
  %v1782 = vmul.f32 %v1214, %v1595
  %v1783 = vmul.f32 %v1216, %v1597
  %v1784 = vmul.f32 %v1267, %v1648
  %v1785 = vmul.f32 %v1269, %v1650
  %v1786 = vmul.f32 %v1320, %v1701
  %v1787 = vmul.f32 %v1322, %v1703
  %v1788 = vmul.f32 %v1373, %v1754
  %v1789 = vmul.f32 %v1375, %v1756
  %v1790 = vpack.c.bf16 %v1766, %v1758
  %v1791 = vpack.c.bf16 %v1767, %v1759
  %v1792 = vpack.c.bf16 %v1768, %v1760
  %v1793 = vpack.c.bf16 %v1769, %v1761
  %v1794 = vpack.c.bf16 %v1770, %v1762
  %v1795 = vpack.c.bf16 %v1771, %v1763
  %v1796 = vpack.c.bf16 %v1772, %v1764
  %v1797 = vpack.c.bf16 %v1773, %v1765
  %v1798 = vpack.c.bf16 %v1782, %v1774
  %v1799 = vpack.c.bf16 %v1783, %v1775
  %v1800 = vpack.c.bf16 %v1784, %v1776
  %v1801 = vpack.c.bf16 %v1785, %v1777
  %v1802 = vpack.c.bf16 %v1786, %v1778
  %v1803 = vpack.c.bf16 %v1787, %v1779
  %v1804 = vpack.c.bf16 %v1788, %v1780
  %v1805 = vpack.c.bf16 %v1789, %v1781
  %v1806 = vld [vmem:[%s3] sm:$0xf]
  %v1807 = vld [vmem:[%s3 + $0x4] sm:$0xf]
  %v1808 = vld [vmem:[%s3 + $0x8] sm:$0xf]
  %v1809 = vld [vmem:[%s3 + $0xc] sm:$0xf]
  %v1810 = vld [vmem:[%s3 + $0x10] sm:$0xf]
  %v1811 = vld [vmem:[%s3 + $0x14] sm:$0xf]
  %v1812 = vld [vmem:[%s3 + $0x18] sm:$0xf]
  %v1813 = vld [vmem:[%s3 + $0x1c] sm:$0xf]
  %v1814 = vld [vmem:[%s3 + $0x20] sm:$0xf]
  %v1815 = vld [vmem:[%s3 + $0x24] sm:$0xf]
  %v1816 = vld [vmem:[%s3 + $0x28] sm:$0xf]
  %v1817 = vld [vmem:[%s3 + $0x2c] sm:$0xf]
  %v1818 = vld [vmem:[%s3 + $0x30] sm:$0xf]
  %v1819 = vld [vmem:[%s3 + $0x34] sm:$0xf]
  %v1820 = vld [vmem:[%s3 + $0x38] sm:$0xf]
  %v1821 = vld [vmem:[%s3 + $0x3c] sm:$0xf]
  %v1822 = vld [vmem:[%s3 + $0x40] sm:$0xf]
  %v1823 = vld [vmem:[%s3 + $0x44] sm:$0xf]
  %v1824 = vld [vmem:[%s3 + $0x48] sm:$0xf]
  %v1825 = vld [vmem:[%s3 + $0x4c] sm:$0xf]
  %v1826 = vld [vmem:[%s3 + $0x50] sm:$0xf]
  %v1827 = vld [vmem:[%s3 + $0x54] sm:$0xf]
  %v1828 = vld [vmem:[%s3 + $0x58] sm:$0xf]
  %v1829 = vld [vmem:[%s3 + $0x5c] sm:$0xf]
  %v1830 = vld [vmem:[%s3 + $0x60] sm:$0xf]
  %v1831 = vld [vmem:[%s3 + $0x64] sm:$0xf]
  %v1832 = vld [vmem:[%s3 + $0x68] sm:$0xf]
  %v1833 = vld [vmem:[%s3 + $0x6c] sm:$0xf]
  %v1834 = vld [vmem:[%s3 + $0x70] sm:$0xf]
  %v1835 = vld [vmem:[%s3 + $0x74] sm:$0xf]
  %v1836 = vld [vmem:[%s3 + $0x78] sm:$0xf]
  %v1837 = vld [vmem:[%s3 + $0x7c] sm:$0xf]
  %v1838 = vld [vmem:[%s3 + $0x80] sm:$0xf]
  %v1839 = vld [vmem:[%s3 + $0x84] sm:$0xf]
  %v1840 = vld [vmem:[%s3 + $0x88] sm:$0xf]
  %v1841 = vld [vmem:[%s3 + $0x8c] sm:$0xf]
  %v1842 = vld [vmem:[%s3 + $0x90] sm:$0xf]
  %v1843 = vld [vmem:[%s3 + $0x94] sm:$0xf]
  %v1844 = vld [vmem:[%s3 + $0x98] sm:$0xf]
  %v1845 = vld [vmem:[%s3 + $0x9c] sm:$0xf]
  %v1846 = vld [vmem:[%s3 + $0xa0] sm:$0xf]
  %v1847 = vld [vmem:[%s3 + $0xa4] sm:$0xf]
  %v1848 = vld [vmem:[%s3 + $0xa8] sm:$0xf]
  %v1849 = vld [vmem:[%s3 + $0xac] sm:$0xf]
  %v1850 = vld [vmem:[%s3 + $0xb0] sm:$0xf]
  %v1851 = vld [vmem:[%s3 + $0xb4] sm:$0xf]
  %v1852 = vld [vmem:[%s3 + $0xb8] sm:$0xf]
  %v1853 = vld [vmem:[%s3 + $0xbc] sm:$0xf]
  %v1854 = vld [vmem:[%s3 + $0xc0] sm:$0xf]
  %v1855 = vld [vmem:[%s3 + $0xc4] sm:$0xf]
  %v1856 = vld [vmem:[%s3 + $0xc8] sm:$0xf]
  %v1857 = vld [vmem:[%s3 + $0xcc] sm:$0xf]
  %v1858 = vld [vmem:[%s3 + $0xd0] sm:$0xf]
  %v1859 = vld [vmem:[%s3 + $0xd4] sm:$0xf]
  %v1860 = vld [vmem:[%s3 + $0xd8] sm:$0xf]
  %v1861 = vld [vmem:[%s3 + $0xdc] sm:$0xf]
  %v1862 = vld [vmem:[%s3 + $0xe0] sm:$0xf]
  %v1863 = vld [vmem:[%s3 + $0xe4] sm:$0xf]
  %v1864 = vld [vmem:[%s3 + $0xe8] sm:$0xf]
  %v1865 = vld [vmem:[%s3 + $0xec] sm:$0xf]
  %v1866 = vld [vmem:[%s3 + $0xf0] sm:$0xf]
  %v1867 = vld [vmem:[%s3 + $0xf4] sm:$0xf]
  %v1868 = vld [vmem:[%s3 + $0xf8] sm:$0xf]
  %v1869 = vld [vmem:[%s3 + $0xfc] sm:$0xf]
  %v1870 = vld [vmem:[%s3 + $0x100] sm:$0xf]
  %v1871 = vld [vmem:[%s3 + $0x104] sm:$0xf]
  %v1872 = vld [vmem:[%s3 + $0x108] sm:$0xf]
  %v1873 = vld [vmem:[%s3 + $0x10c] sm:$0xf]
  %v1874 = vld [vmem:[%s3 + $0x110] sm:$0xf]
  %v1875 = vld [vmem:[%s3 + $0x114] sm:$0xf]
  %v1876 = vld [vmem:[%s3 + $0x118] sm:$0xf]
  %v1877 = vld [vmem:[%s3 + $0x11c] sm:$0xf]
  %v1878 = vld [vmem:[%s3 + $0x120] sm:$0xf]
  %v1879 = vld [vmem:[%s3 + $0x124] sm:$0xf]
  %v1880 = vld [vmem:[%s3 + $0x128] sm:$0xf]
  %v1881 = vld [vmem:[%s3 + $0x12c] sm:$0xf]
  %v1882 = vld [vmem:[%s3 + $0x130] sm:$0xf]
  %v1883 = vld [vmem:[%s3 + $0x134] sm:$0xf]
  %v1884 = vld [vmem:[%s3 + $0x138] sm:$0xf]
  %v1885 = vld [vmem:[%s3 + $0x13c] sm:$0xf]
  %v1886 = vld [vmem:[%s3 + $0x140] sm:$0xf]
  %v1887 = vld [vmem:[%s3 + $0x144] sm:$0xf]
  %v1888 = vld [vmem:[%s3 + $0x148] sm:$0xf]
  %v1889 = vld [vmem:[%s3 + $0x14c] sm:$0xf]
  %v1890 = vld [vmem:[%s3 + $0x150] sm:$0xf]
  %v1891 = vld [vmem:[%s3 + $0x154] sm:$0xf]
  %v1892 = vld [vmem:[%s3 + $0x158] sm:$0xf]
  %v1893 = vld [vmem:[%s3 + $0x15c] sm:$0xf]
  %v1894 = vld [vmem:[%s3 + $0x160] sm:$0xf]
  %v1895 = vld [vmem:[%s3 + $0x164] sm:$0xf]
  %v1896 = vld [vmem:[%s3 + $0x168] sm:$0xf]
  %v1897 = vld [vmem:[%s3 + $0x16c] sm:$0xf]
  %v1898 = vld [vmem:[%s3 + $0x170] sm:$0xf]
  %v1899 = vld [vmem:[%s3 + $0x174] sm:$0xf]
  %v1900 = vld [vmem:[%s3 + $0x178] sm:$0xf]
  %v1901 = vld [vmem:[%s3 + $0x17c] sm:$0xf]
  %v1902 = vld [vmem:[%s3 + $0x180] sm:$0xf]
  %v1903 = vld [vmem:[%s3 + $0x184] sm:$0xf]
  %v1904 = vld [vmem:[%s3 + $0x188] sm:$0xf]
  %v1905 = vld [vmem:[%s3 + $0x18c] sm:$0xf]
  %v1906 = vld [vmem:[%s3 + $0x190] sm:$0xf]
  %v1907 = vld [vmem:[%s3 + $0x194] sm:$0xf]
  %v1908 = vld [vmem:[%s3 + $0x198] sm:$0xf]
  %v1909 = vld [vmem:[%s3 + $0x19c] sm:$0xf]
  %v1910 = vld [vmem:[%s3 + $0x1a0] sm:$0xf]
  %v1911 = vld [vmem:[%s3 + $0x1a4] sm:$0xf]
  %v1912 = vld [vmem:[%s3 + $0x1a8] sm:$0xf]
  %v1913 = vld [vmem:[%s3 + $0x1ac] sm:$0xf]
  %v1914 = vld [vmem:[%s3 + $0x1b0] sm:$0xf]
  %v1915 = vld [vmem:[%s3 + $0x1b4] sm:$0xf]
  %v1916 = vld [vmem:[%s3 + $0x1b8] sm:$0xf]
  %v1917 = vld [vmem:[%s3 + $0x1bc] sm:$0xf]
  %v1918 = vld [vmem:[%s3 + $0x1c0] sm:$0xf]
  %v1919 = vld [vmem:[%s3 + $0x1c4] sm:$0xf]
  %v1920 = vld [vmem:[%s3 + $0x1c8] sm:$0xf]
  %v1921 = vld [vmem:[%s3 + $0x1cc] sm:$0xf]
  %v1922 = vld [vmem:[%s3 + $0x1d0] sm:$0xf]
  %v1923 = vld [vmem:[%s3 + $0x1d4] sm:$0xf]
  %v1924 = vld [vmem:[%s3 + $0x1d8] sm:$0xf]
  %v1925 = vld [vmem:[%s3 + $0x1dc] sm:$0xf]
  %v1926 = vld [vmem:[%s3 + $0x1e0] sm:$0xf]
  %v1927 = vld [vmem:[%s3 + $0x1e4] sm:$0xf]
  %v1928 = vld [vmem:[%s3 + $0x1e8] sm:$0xf]
  %v1929 = vld [vmem:[%s3 + $0x1ec] sm:$0xf]
  %v1930 = vld [vmem:[%s3 + $0x1f0] sm:$0xf]
  %v1931 = vld [vmem:[%s3 + $0x1f4] sm:$0xf]
  %v1932 = vld [vmem:[%s3 + $0x1f8] sm:$0xf]
  %v1933 = vld [vmem:[%s3 + $0x1fc] sm:$0xf]
  %v1934 = vld [vmem:[%s4 + $0x88] sm:$0xff]
  %v1935 = vld [vmem:[%s4 + $0x90] sm:$0xff]
  %v1936 = vld [vmem:[%s4 + $0x98] sm:$0xff]
  %v1937 = vld [vmem:[%s4 + $0xa0] sm:$0xff]
  %v1938 = vld [vmem:[%s4 + $0xa8] sm:$0xff]
  %v1939 = vld [vmem:[%s4 + $0xb0] sm:$0xff]
  %v1940 = vld [vmem:[%s4 + $0xb8] sm:$0xff]
  %v1941 = vld [vmem:[%s4 + $0xc0] sm:$0xff]
  %v1942 = vld [vmem:[%s4 + $0xc8] sm:$0xff]
  %v1943 = vld [vmem:[%s4 + $0xd0] sm:$0xff]
  %v1944 = vld [vmem:[%s4 + $0xd8] sm:$0x1]
  %v1946 = vsel %vm1539, %v1068, 0
  %v1949 = vsel %vm1539, %v1069, 0
  %v1952 = vsel %vm1539, %v1070, 0
  %v1955 = vsel %vm1539, %v1071, 0
  %1957 = vmatprep.subr.mxu0 0.0
  %1958 = vmatpush1.msra.mxu0 %v1934
  %1959 = vmatprep.subr.mxu0 0.0
  %1960 = vmatpush1.msra.mxu0 %v1935
  %1961 = vmatprep.subr.mxu0 0.0
  %1962 = vmatpush1.msra.mxu0 %v1936
  %1963 = vmatprep.subr.mxu0 0.0
  %1964 = vmatpush1.msra.mxu0 %v1937
  %1965 = vmatprep.subr.mxu0 0.0
  %1966 = vmatpush1.msra.mxu0 %v1938
  %1967 = vmatprep.subr.mxu0 0.0
  %1968 = vmatpush1.msra.mxu0 %v1939
  %1969 = vmatprep.subr.mxu0 0.0
  %1970 = vmatpush1.msra.mxu0 %v1940
  %1971 = vmatprep.subr.mxu0 0.0
  %1972 = vmatpush1.msra.mxu0 %v1941
  %1973 = vmatprep.subr.mxu0 0.0
  %1974 = vmatpush1.msra.mxu0 0.0
  %1975 = vmatprep.subr.mxu0 0.0
  %1976 = vmatpush1.msra.mxu0 0.0
  %1977 = vmatprep.subr.mxu0 0.0
  %1978 = vmatpush1.msra.mxu0 0.0
  %1979 = vmatprep.subr.mxu0 0.0
  %1980 = vmatpush1.msra.mxu0 0.0
  %1981 = vmatprep.subr.mxu0 0.0
  %1982 = vmatpush1.msra.mxu0 0.0
  %1983 = vmatprep.subr.mxu0 0.0
  %1984 = vmatpush1.msra.mxu0 0.0
  %1985 = vmatprep.subr.mxu0 0.0
  %1986 = vmatpush1.msra.mxu0 0.0
  %1987 = vmatprep.subr.mxu0 0.0
  %1988 = vmatpush1.msra.mxu0 0.0
  %1989 = vmatprep.subr.mxu0 0.0
  %1990 = vmatpush1.msra.mxu0 0.0
  %1991 = vmatprep.subr.mxu0 0.0
  %1992 = vmatpush1.msra.mxu0 0.0
  %1993 = vmatprep.subr.mxu0 0.0
  %1994 = vmatpush1.msra.mxu0 0.0
  %1995 = vmatprep.subr.mxu0 0.0
  %1996 = vmatpush1.msra.mxu0 0.0
  %1997 = vmatprep.subr.mxu0 0.0
  %1998 = vmatpush1.msra.mxu0 0.0
  %1999 = vmatprep.subr.mxu0 0.0
  %2000 = vmatpush1.msra.mxu0 0.0
  %2001 = vmatprep.subr.mxu0 0.0
  %2002 = vmatpush1.msra.mxu0 0.0
  %2003 = vmatprep.subr.mxu0 0.0
  %2004 = vmatpush1.msra.mxu0 0.0
  %2005 = vmatprep.subr.mxu0 0.0
  %2006 = vmatpush1.msra.mxu0 0.0
  %2007 = vmatprep.subr.mxu0 0.0
  %2008 = vmatpush1.msra.mxu0 0.0
  %2009 = vmatprep.subr.mxu0 0.0
  %2010 = vmatpush1.msra.mxu0 0.0
  %2011 = vmatprep.subr.mxu0 0.0
  %2012 = vmatpush1.msra.mxu0 0.0
  %2013 = vmatprep.subr.mxu0 0.0
  %2014 = vmatpush1.msra.mxu0 0.0
  %2015 = vmatprep.subr.mxu0 0.0
  %2016 = vmatpush1.msra.mxu0 0.0
  %2017 = vmatprep.subr.mxu0 0.0
  %2018 = vmatpush1.msra.mxu0 0.0
  %2019 = vmatprep.subr.mxu0 0.0
  %2020 = vmatpush1.msra.mxu0 0.0
  %2021 = vmatprep.mubr.f32.mxu0 0.0
  %2022 = vmatmul.mubr.f32.gmra.mrb[0].mxu0 %v1946
  %v2023 = vpop.f32.mrb[0].mxu0
  %v2024 = vadd.f32 0.0, %v2023
  %v2025 = vpop.f32.mrb[0].mxu0
  %2026 = vmatprep.mubr.f32.mxu0 0.0
  %2027 = vmatmul.mubr.f32.gmra.mrb[0].mxu0 %v1949
  %v2028 = vpop.f32.mrb[0].mxu0
  %v2029 = vadd.f32 0.0, %v2028
  %v2030 = vpop.f32.mrb[0].mxu0
  %2031 = vmatprep.mubr.f32.mxu0 0.0
  %2032 = vmatmul.mubr.f32.gmra.mrb[0].mxu0 %v1952
  %v2033 = vpop.f32.mrb[0].mxu0
  %v2034 = vadd.f32 0.0, %v2033
  %v2035 = vpop.f32.mrb[0].mxu0
  %2036 = vmatprep.mubr.f32.mxu0 0.0
  %2037 = vmatmul.mubr.f32.gmra.mrb[0].mxu0 %v1955
  %v2038 = vpop.f32.mrb[0].mxu0
  %v2039 = vadd.f32 0.0, %v2038
  %v2040 = vpop.f32.mrb[0].mxu0
  %2041 = vdwg.mxu0
  %v2170 = vunpack.c.l.b16 %v1806
  %v2171 = vunpack.c.l.b16 %v1807
  %v2172 = vunpack.c.l.b16 %v1808
  %v2173 = vunpack.c.l.b16 %v1809
  %v2174 = vunpack.c.l.b16 %v1810
  %v2175 = vunpack.c.l.b16 %v1811
  %v2176 = vunpack.c.l.b16 %v1812
  %v2177 = vunpack.c.l.b16 %v1813
  %v2178 = vunpack.c.l.b16 %v1814
  %v2179 = vunpack.c.l.b16 %v1815
  %v2180 = vunpack.c.l.b16 %v1816
  %v2181 = vunpack.c.l.b16 %v1817
  %v2182 = vunpack.c.l.b16 %v1818
  %v2183 = vunpack.c.l.b16 %v1819
  %v2184 = vunpack.c.l.b16 %v1820
  %v2185 = vunpack.c.l.b16 %v1821
  %v2186 = vunpack.c.l.b16 %v1822
  %v2187 = vunpack.c.l.b16 %v1823
  %v2188 = vunpack.c.l.b16 %v1824
  %v2189 = vunpack.c.l.b16 %v1825
  %v2190 = vunpack.c.l.b16 %v1826
  %v2191 = vunpack.c.l.b16 %v1827
  %v2192 = vunpack.c.l.b16 %v1828
  %v2193 = vunpack.c.l.b16 %v1829
  %v2194 = vunpack.c.l.b16 %v1830
  %v2195 = vunpack.c.l.b16 %v1831
  %v2196 = vunpack.c.l.b16 %v1832
  %v2197 = vunpack.c.l.b16 %v1833
  %v2198 = vunpack.c.l.b16 %v1834
  %v2199 = vunpack.c.l.b16 %v1835
  %v2200 = vunpack.c.l.b16 %v1836
  %v2201 = vunpack.c.l.b16 %v1837
  %v2202 = vunpack.c.l.b16 %v1838
  %v2203 = vunpack.c.l.b16 %v1839
  %v2204 = vunpack.c.l.b16 %v1840
  %v2205 = vunpack.c.l.b16 %v1841
  %v2206 = vunpack.c.l.b16 %v1842
  %v2207 = vunpack.c.l.b16 %v1843
  %v2208 = vunpack.c.l.b16 %v1844
  %v2209 = vunpack.c.l.b16 %v1845
  %v2210 = vunpack.c.l.b16 %v1846
  %v2211 = vunpack.c.l.b16 %v1847
  %v2212 = vunpack.c.l.b16 %v1848
  %v2213 = vunpack.c.l.b16 %v1849
  %v2214 = vunpack.c.l.b16 %v1850
  %v2215 = vunpack.c.l.b16 %v1851
  %v2216 = vunpack.c.l.b16 %v1852
  %v2217 = vunpack.c.l.b16 %v1853
  %v2218 = vunpack.c.l.b16 %v1854
  %v2219 = vunpack.c.l.b16 %v1855
  %v2220 = vunpack.c.l.b16 %v1856
  %v2221 = vunpack.c.l.b16 %v1857
  %v2222 = vunpack.c.l.b16 %v1858
  %v2223 = vunpack.c.l.b16 %v1859
  %v2224 = vunpack.c.l.b16 %v1860
  %v2225 = vunpack.c.l.b16 %v1861
  %v2226 = vunpack.c.l.b16 %v1862
  %v2227 = vunpack.c.l.b16 %v1863
  %v2228 = vunpack.c.l.b16 %v1864
  %v2229 = vunpack.c.l.b16 %v1865
  %v2230 = vunpack.c.l.b16 %v1866
  %v2231 = vunpack.c.l.b16 %v1867
  %v2232 = vunpack.c.l.b16 %v1868
  %v2233 = vunpack.c.l.b16 %v1869
  %v2234 = vunpack.c.l.b16 %v1870
  %v2235 = vunpack.c.l.b16 %v1871
  %v2236 = vunpack.c.l.b16 %v1872
  %v2237 = vunpack.c.l.b16 %v1873
  %v2238 = vunpack.c.l.b16 %v1874
  %v2239 = vunpack.c.l.b16 %v1875
  %v2240 = vunpack.c.l.b16 %v1876
  %v2241 = vunpack.c.l.b16 %v1877
  %v2242 = vunpack.c.l.b16 %v1878
  %v2243 = vunpack.c.l.b16 %v1879
  %v2244 = vunpack.c.l.b16 %v1880
  %v2245 = vunpack.c.l.b16 %v1881
  %v2246 = vunpack.c.l.b16 %v1882
  %v2247 = vunpack.c.l.b16 %v1883
  %v2248 = vunpack.c.l.b16 %v1884
  %v2249 = vunpack.c.l.b16 %v1885
  %v2250 = vunpack.c.l.b16 %v1886
  %v2251 = vunpack.c.l.b16 %v1887
  %v2252 = vunpack.c.l.b16 %v1888
  %v2253 = vunpack.c.l.b16 %v1889
  %v2254 = vunpack.c.l.b16 %v1890
  %v2255 = vunpack.c.l.b16 %v1891
  %v2256 = vunpack.c.l.b16 %v1892
  %v2257 = vunpack.c.l.b16 %v1893
  %v2258 = vunpack.c.l.b16 %v1894
  %v2259 = vunpack.c.l.b16 %v1895
  %v2260 = vunpack.c.l.b16 %v1896
  %v2261 = vunpack.c.l.b16 %v1897
  %v2262 = vunpack.c.l.b16 %v1898
  %v2263 = vunpack.c.l.b16 %v1899
  %v2264 = vunpack.c.l.b16 %v1900
  %v2265 = vunpack.c.l.b16 %v1901
  %v2266 = vunpack.c.l.b16 %v1902
  %v2267 = vunpack.c.l.b16 %v1903
  %v2268 = vunpack.c.l.b16 %v1904
  %v2269 = vunpack.c.l.b16 %v1905
  %v2270 = vunpack.c.l.b16 %v1906
  %v2271 = vunpack.c.l.b16 %v1907
  %v2272 = vunpack.c.l.b16 %v1908
  %v2273 = vunpack.c.l.b16 %v1909
  %v2274 = vunpack.c.l.b16 %v1910
  %v2275 = vunpack.c.l.b16 %v1911
  %v2276 = vunpack.c.l.b16 %v1912
  %v2277 = vunpack.c.l.b16 %v1913
  %v2278 = vunpack.c.l.b16 %v1914
  %v2279 = vunpack.c.l.b16 %v1915
  %v2280 = vunpack.c.l.b16 %v1916
  %v2281 = vunpack.c.l.b16 %v1917
  %v2282 = vunpack.c.l.b16 %v1918
  %v2283 = vunpack.c.l.b16 %v1919
  %v2284 = vunpack.c.l.b16 %v1920
  %v2285 = vunpack.c.l.b16 %v1921
  %v2286 = vunpack.c.l.b16 %v1922
  %v2287 = vunpack.c.l.b16 %v1923
  %v2288 = vunpack.c.l.b16 %v1924
  %v2289 = vunpack.c.l.b16 %v1925
  %v2290 = vunpack.c.l.b16 %v1926
  %v2291 = vunpack.c.l.b16 %v1927
  %v2292 = vunpack.c.l.b16 %v1928
  %v2293 = vunpack.c.l.b16 %v1929
  %v2294 = vunpack.c.l.b16 %v1930
  %v2295 = vunpack.c.l.b16 %v1931
  %v2296 = vunpack.c.l.b16 %v1932
  %v2297 = vunpack.c.l.b16 %v1933
  %v2298 = vpack.c.b16 %v2171, %v2170
  %v2299 = vpack.c.b16 %v2173, %v2172
  %v2300 = vpack.c.b16 %v2175, %v2174
  %v2301 = vpack.c.b16 %v2177, %v2176
  %v2302 = vpack.c.b16 %v2179, %v2178
  %v2303 = vpack.c.b16 %v2181, %v2180
  %v2304 = vpack.c.b16 %v2183, %v2182
  %v2305 = vpack.c.b16 %v2185, %v2184
  %v2306 = vpack.c.b16 %v2187, %v2186
  %v2307 = vpack.c.b16 %v2189, %v2188
  %v2308 = vpack.c.b16 %v2191, %v2190
  %v2309 = vpack.c.b16 %v2193, %v2192
  %v2310 = vpack.c.b16 %v2195, %v2194
  %v2311 = vpack.c.b16 %v2197, %v2196
  %v2312 = vpack.c.b16 %v2199, %v2198
  %v2313 = vpack.c.b16 %v2201, %v2200
  %v2314 = vpack.c.b16 %v2203, %v2202
  %v2315 = vpack.c.b16 %v2205, %v2204
  %v2316 = vpack.c.b16 %v2207, %v2206
  %v2317 = vpack.c.b16 %v2209, %v2208
  %v2318 = vpack.c.b16 %v2211, %v2210
  %v2319 = vpack.c.b16 %v2213, %v2212
  %v2320 = vpack.c.b16 %v2215, %v2214
  %v2321 = vpack.c.b16 %v2217, %v2216
  %v2322 = vpack.c.b16 %v2219, %v2218
  %v2323 = vpack.c.b16 %v2221, %v2220
  %v2324 = vpack.c.b16 %v2223, %v2222
  %v2325 = vpack.c.b16 %v2225, %v2224
  %v2326 = vpack.c.b16 %v2227, %v2226
  %v2327 = vpack.c.b16 %v2229, %v2228
  %v2328 = vpack.c.b16 %v2231, %v2230
  %v2329 = vpack.c.b16 %v2233, %v2232
  %v2330 = vpack.c.b16 %v2235, %v2234
  %v2331 = vpack.c.b16 %v2237, %v2236
  %v2332 = vpack.c.b16 %v2239, %v2238
  %v2333 = vpack.c.b16 %v2241, %v2240
  %v2334 = vpack.c.b16 %v2243, %v2242
  %v2335 = vpack.c.b16 %v2245, %v2244
  %v2336 = vpack.c.b16 %v2247, %v2246
  %v2337 = vpack.c.b16 %v2249, %v2248
  %v2338 = vpack.c.b16 %v2251, %v2250
  %v2339 = vpack.c.b16 %v2253, %v2252
  %v2340 = vpack.c.b16 %v2255, %v2254
  %v2341 = vpack.c.b16 %v2257, %v2256
  %v2342 = vpack.c.b16 %v2259, %v2258
  %v2343 = vpack.c.b16 %v2261, %v2260
  %v2344 = vpack.c.b16 %v2263, %v2262
  %v2345 = vpack.c.b16 %v2265, %v2264
  %v2346 = vpack.c.b16 %v2267, %v2266
  %v2347 = vpack.c.b16 %v2269, %v2268
  %v2348 = vpack.c.b16 %v2271, %v2270
  %v2349 = vpack.c.b16 %v2273, %v2272
  %v2350 = vpack.c.b16 %v2275, %v2274
  %v2351 = vpack.c.b16 %v2277, %v2276
  %v2352 = vpack.c.b16 %v2279, %v2278
  %v2353 = vpack.c.b16 %v2281, %v2280
  %v2354 = vpack.c.b16 %v2283, %v2282
  %v2355 = vpack.c.b16 %v2285, %v2284
  %v2356 = vpack.c.b16 %v2287, %v2286
  %v2357 = vpack.c.b16 %v2289, %v2288
  %v2358 = vpack.c.b16 %v2291, %v2290
  %v2359 = vpack.c.b16 %v2293, %v2292
  %v2360 = vpack.c.b16 %v2295, %v2294
  %v2361 = vpack.c.b16 %v2297, %v2296
  %2426 = vmatprep.subr.bf16.mxu0 0
  %2427 = vmatpush1.bf16.msra.mxu0 %v2298
  %2428 = vmatprep.subr.bf16.mxu0 0
  %2429 = vmatpush1.bf16.msra.mxu0 %v2299
  %2430 = vmatprep.subr.bf16.mxu0 0
  %2431 = vmatpush1.bf16.msra.mxu0 %v2300
  %2432 = vmatprep.subr.bf16.mxu0 0
  %2433 = vmatpush1.bf16.msra.mxu0 %v2301
  %2434 = vmatprep.subr.bf16.mxu0 0
  %2435 = vmatpush1.bf16.msra.mxu0 %v2302
  %2436 = vmatprep.subr.bf16.mxu0 0
  %2437 = vmatpush1.bf16.msra.mxu0 %v2303
  %2438 = vmatprep.subr.bf16.mxu0 0
  %2439 = vmatpush1.bf16.msra.mxu0 %v2304
  %2440 = vmatprep.subr.bf16.mxu0 0
  %2441 = vmatpush1.bf16.msra.mxu0 %v2305
  %2442 = vmatprep.subr.bf16.mxu0 0
  %2443 = vmatpush1.bf16.msra.mxu0 %v2306
  %2444 = vmatprep.subr.bf16.mxu0 0
  %2445 = vmatpush1.bf16.msra.mxu0 %v2307
  %2446 = vmatprep.subr.bf16.mxu0 0
  %2447 = vmatpush1.bf16.msra.mxu0 %v2308
  %2448 = vmatprep.subr.bf16.mxu0 0
  %2449 = vmatpush1.bf16.msra.mxu0 %v2309
  %2450 = vmatprep.subr.bf16.mxu0 0
  %2451 = vmatpush1.bf16.msra.mxu0 %v2310
  %2452 = vmatprep.subr.bf16.mxu0 0
  %2453 = vmatpush1.bf16.msra.mxu0 %v2311
  %2454 = vmatprep.subr.bf16.mxu0 0
  %2455 = vmatpush1.bf16.msra.mxu0 %v2312
  %2456 = vmatprep.subr.bf16.mxu0 0
  %2457 = vmatpush1.bf16.msra.mxu0 %v2313
  %2458 = vmatprep.mubr.bf16.mxu0 %v1791
  %2459 = vmatmul.mubr.bf16.gmra.mrb[0].mxu0 %v1790
  %v2460 = vpop.f32.mrb[0].mxu0
  %v2461 = vadd.f32 %v2024, %v2460
  %v2462 = vpop.f32.mrb[0].mxu0
  %v2463 = vpop.f32.mrb[0].mxu0
  %v2464 = vadd.f32 %v2029, %v2463
  %v2465 = vpop.f32.mrb[0].mxu0
  %2466 = vmatprep.mubr.bf16.mxu0 %v1799
  %2467 = vmatmul.mubr.bf16.gmra.mrb[0].mxu0 %v1798
  %v2468 = vpop.f32.mrb[0].mxu0
  %v2469 = vadd.f32 %v2034, %v2468
  %v2470 = vpop.f32.mrb[0].mxu0
  %v2471 = vpop.f32.mrb[0].mxu0
  %v2472 = vadd.f32 %v2039, %v2471
  %v2473 = vpop.f32.mrb[0].mxu0
  %2474 = vdwg.mxu0
  %2475 = vmatprep.subr.bf16.mxu0 0
  %2476 = vmatpush1.bf16.msra.mxu0 %v2314
  %2477 = vmatprep.subr.bf16.mxu0 0
  %2478 = vmatpush1.bf16.msra.mxu0 %v2315
  %2479 = vmatprep.subr.bf16.mxu0 0
  %2480 = vmatpush1.bf16.msra.mxu0 %v2316
  %2481 = vmatprep.subr.bf16.mxu0 0
  %2482 = vmatpush1.bf16.msra.mxu0 %v2317
  %2483 = vmatprep.subr.bf16.mxu0 0
  %2484 = vmatpush1.bf16.msra.mxu0 %v2318
  %2485 = vmatprep.subr.bf16.mxu0 0
  %2486 = vmatpush1.bf16.msra.mxu0 %v2319
  %2487 = vmatprep.subr.bf16.mxu0 0
  %2488 = vmatpush1.bf16.msra.mxu0 %v2320
  %2489 = vmatprep.subr.bf16.mxu0 0
  %2490 = vmatpush1.bf16.msra.mxu0 %v2321
  %2491 = vmatprep.subr.bf16.mxu0 0
  %2492 = vmatpush1.bf16.msra.mxu0 %v2322
  %2493 = vmatprep.subr.bf16.mxu0 0
  %2494 = vmatpush1.bf16.msra.mxu0 %v2323
  %2495 = vmatprep.subr.bf16.mxu0 0
  %2496 = vmatpush1.bf16.msra.mxu0 %v2324
  %2497 = vmatprep.subr.bf16.mxu0 0
  %2498 = vmatpush1.bf16.msra.mxu0 %v2325
  %2499 = vmatprep.subr.bf16.mxu0 0
  %2500 = vmatpush1.bf16.msra.mxu0 %v2326
  %2501 = vmatprep.subr.bf16.mxu0 0
  %2502 = vmatpush1.bf16.msra.mxu0 %v2327
  %2503 = vmatprep.subr.bf16.mxu0 0
  %2504 = vmatpush1.bf16.msra.mxu0 %v2328
  %2505 = vmatprep.subr.bf16.mxu0 0
  %2506 = vmatpush1.bf16.msra.mxu0 %v2329
  %2507 = vmatprep.mubr.bf16.mxu0 %v1793
  %2508 = vmatmul.mubr.bf16.gmra.mrb[0].mxu0 %v1792
  %v2509 = vpop.f32.mrb[0].mxu0
  %v2510 = vadd.f32 %v2461, %v2509
  %v2511 = vpop.f32.mrb[0].mxu0
  %v2512 = vpop.f32.mrb[0].mxu0
  %v2513 = vadd.f32 %v2464, %v2512
  %v2514 = vpop.f32.mrb[0].mxu0
  %2515 = vmatprep.mubr.bf16.mxu0 %v1801
  %2516 = vmatmul.mubr.bf16.gmra.mrb[0].mxu0 %v1800
  %v2517 = vpop.f32.mrb[0].mxu0
  %v2518 = vadd.f32 %v2469, %v2517
  %v2519 = vpop.f32.mrb[0].mxu0
  %v2520 = vpop.f32.mrb[0].mxu0
  %v2521 = vadd.f32 %v2472, %v2520
  %v2522 = vpop.f32.mrb[0].mxu0
  %2523 = vdwg.mxu0
  %2524 = vmatprep.subr.bf16.mxu0 0
  %2525 = vmatpush1.bf16.msra.mxu0 %v2330
  %2526 = vmatprep.subr.bf16.mxu0 0
  %2527 = vmatpush1.bf16.msra.mxu0 %v2331
  %2528 = vmatprep.subr.bf16.mxu0 0
  %2529 = vmatpush1.bf16.msra.mxu0 %v2332
  %2530 = vmatprep.subr.bf16.mxu0 0
  %2531 = vmatpush1.bf16.msra.mxu0 %v2333
  %2532 = vmatprep.subr.bf16.mxu0 0
  %2533 = vmatpush1.bf16.msra.mxu0 %v2334
  %2534 = vmatprep.subr.bf16.mxu0 0
  %2535 = vmatpush1.bf16.msra.mxu0 %v2335
  %2536 = vmatprep.subr.bf16.mxu0 0
  %2537 = vmatpush1.bf16.msra.mxu0 %v2336
  %2538 = vmatprep.subr.bf16.mxu0 0
  %2539 = vmatpush1.bf16.msra.mxu0 %v2337
  %2540 = vmatprep.subr.bf16.mxu0 0
  %2541 = vmatpush1.bf16.msra.mxu0 %v2338
  %2542 = vmatprep.subr.bf16.mxu0 0
  %2543 = vmatpush1.bf16.msra.mxu0 %v2339
  %2544 = vmatprep.subr.bf16.mxu0 0
  %2545 = vmatpush1.bf16.msra.mxu0 %v2340
  %2546 = vmatprep.subr.bf16.mxu0 0
  %2547 = vmatpush1.bf16.msra.mxu0 %v2341
  %2548 = vmatprep.subr.bf16.mxu0 0
  %2549 = vmatpush1.bf16.msra.mxu0 %v2342
  %2550 = vmatprep.subr.bf16.mxu0 0
  %2551 = vmatpush1.bf16.msra.mxu0 %v2343
  %2552 = vmatprep.subr.bf16.mxu0 0
  %2553 = vmatpush1.bf16.msra.mxu0 %v2344
  %2554 = vmatprep.subr.bf16.mxu0 0
  %2555 = vmatpush1.bf16.msra.mxu0 %v2345
  %2556 = vmatprep.mubr.bf16.mxu0 %v1795
  %2557 = vmatmul.mubr.bf16.gmra.mrb[0].mxu0 %v1794
  %v2558 = vpop.f32.mrb[0].mxu0
  %v2559 = vadd.f32 %v2510, %v2558
  %v2560 = vpop.f32.mrb[0].mxu0
  %v2561 = vpop.f32.mrb[0].mxu0
  %v2562 = vadd.f32 %v2513, %v2561
  %v2563 = vpop.f32.mrb[0].mxu0
  %2564 = vmatprep.mubr.bf16.mxu0 %v1803
  %2565 = vmatmul.mubr.bf16.gmra.mrb[0].mxu0 %v1802
  %v2566 = vpop.f32.mrb[0].mxu0
  %v2567 = vadd.f32 %v2518, %v2566
  %v2568 = vpop.f32.mrb[0].mxu0
  %v2569 = vpop.f32.mrb[0].mxu0
  %v2570 = vadd.f32 %v2521, %v2569
  %v2571 = vpop.f32.mrb[0].mxu0
  %2572 = vdwg.mxu0
  %2573 = vmatprep.subr.bf16.mxu0 0
  %2574 = vmatpush1.bf16.msra.mxu0 %v2346
  %2575 = vmatprep.subr.bf16.mxu0 0
  %2576 = vmatpush1.bf16.msra.mxu0 %v2347
  %2577 = vmatprep.subr.bf16.mxu0 0
  %2578 = vmatpush1.bf16.msra.mxu0 %v2348
  %2579 = vmatprep.subr.bf16.mxu0 0
  %2580 = vmatpush1.bf16.msra.mxu0 %v2349
  %2581 = vmatprep.subr.bf16.mxu0 0
  %2582 = vmatpush1.bf16.msra.mxu0 %v2350
  %2583 = vmatprep.subr.bf16.mxu0 0
  %2584 = vmatpush1.bf16.msra.mxu0 %v2351
  %2585 = vmatprep.subr.bf16.mxu0 0
  %2586 = vmatpush1.bf16.msra.mxu0 %v2352
  %2587 = vmatprep.subr.bf16.mxu0 0
  %2588 = vmatpush1.bf16.msra.mxu0 %v2353
  %2589 = vmatprep.subr.bf16.mxu0 0
  %2590 = vmatpush1.bf16.msra.mxu0 %v2354
  %2591 = vmatprep.subr.bf16.mxu0 0
  %2592 = vmatpush1.bf16.msra.mxu0 %v2355
  %2593 = vmatprep.subr.bf16.mxu0 0
  %2594 = vmatpush1.bf16.msra.mxu0 %v2356
  %2595 = vmatprep.subr.bf16.mxu0 0
  %2596 = vmatpush1.bf16.msra.mxu0 %v2357
  %2597 = vmatprep.subr.bf16.mxu0 0
  %2598 = vmatpush1.bf16.msra.mxu0 %v2358
  %2599 = vmatprep.subr.bf16.mxu0 0
  %2600 = vmatpush1.bf16.msra.mxu0 %v2359
  %2601 = vmatprep.subr.bf16.mxu0 0
  %2602 = vmatpush1.bf16.msra.mxu0 %v2360
  %2603 = vmatprep.subr.bf16.mxu0 0
  %2604 = vmatpush1.bf16.msra.mxu0 %v2361
  %2605 = vmatprep.mubr.bf16.mxu0 %v1797
  %2606 = vmatmul.mubr.bf16.gmra.mrb[0].mxu0 %v1796
  %v2607 = vpop.f32.mrb[0].mxu0
  %v2608 = vadd.f32 %v2559, %v2607
  %v2609 = vpop.f32.mrb[0].mxu0
  %v2610 = vpop.f32.mrb[0].mxu0
  %v2611 = vadd.f32 %v2562, %v2610
  %v2612 = vpop.f32.mrb[0].mxu0
  %2613 = vmatprep.mubr.bf16.mxu0 %v1805
  %2614 = vmatmul.mubr.bf16.gmra.mrb[0].mxu0 %v1804
  %v2615 = vpop.f32.mrb[0].mxu0
  %v2616 = vadd.f32 %v2567, %v2615
  %v2617 = vpop.f32.mrb[0].mxu0
  %v2618 = vpop.f32.mrb[0].mxu0
  %v2619 = vadd.f32 %v2570, %v2618
  %v2620 = vpop.f32.mrb[0].mxu0
  %2621 = vdwg.mxu0
  %v2623 = vsel %vm1158, %v1072, 0
  %v2626 = vsel %vm1158, %v1073, 0
  %v2629 = vsel %vm1158, %v1074, 0
  %v2632 = vsel %vm1158, %v1075, 0
  %2634 = vmatprep.subr.mxu0 0.0
  %2635 = vmatpush1.msra.mxu0 %v1942
  %2636 = vmatprep.subr.mxu0 0.0
  %2637 = vmatpush1.msra.mxu0 %v1943
  %2638 = vmatprep.subr.mxu0 0.0
  %2639 = vmatpush1.msra.mxu0 0.0
  %2640 = vmatprep.subr.mxu0 0.0
  %2641 = vmatpush1.msra.mxu0 0.0
  %2642 = vmatprep.subr.mxu0 0.0
  %2643 = vmatpush1.msra.mxu0 0.0
  %2644 = vmatprep.subr.mxu0 0.0
  %2645 = vmatpush1.msra.mxu0 0.0
  %2646 = vmatprep.subr.mxu0 0.0
  %2647 = vmatpush1.msra.mxu0 0.0
  %2648 = vmatprep.subr.mxu0 0.0
  %2649 = vmatpush1.msra.mxu0 0.0
  %2650 = vmatprep.subr.mxu0 0.0
  %2651 = vmatpush1.msra.mxu0 0.0
  %2652 = vmatprep.subr.mxu0 0.0
  %2653 = vmatpush1.msra.mxu0 0.0
  %2654 = vmatprep.subr.mxu0 0.0
  %2655 = vmatpush1.msra.mxu0 0.0
  %2656 = vmatprep.subr.mxu0 0.0
  %2657 = vmatpush1.msra.mxu0 0.0
  %2658 = vmatprep.subr.mxu0 0.0
  %2659 = vmatpush1.msra.mxu0 0.0
  %2660 = vmatprep.subr.mxu0 0.0
  %2661 = vmatpush1.msra.mxu0 0.0
  %2662 = vmatprep.subr.mxu0 0.0
  %2663 = vmatpush1.msra.mxu0 0.0
  %2664 = vmatprep.subr.mxu0 0.0
  %2665 = vmatpush1.msra.mxu0 0.0
  %2666 = vmatprep.subr.mxu0 0.0
  %2667 = vmatpush1.msra.mxu0 0.0
  %2668 = vmatprep.subr.mxu0 0.0
  %2669 = vmatpush1.msra.mxu0 0.0
  %2670 = vmatprep.subr.mxu0 0.0
  %2671 = vmatpush1.msra.mxu0 0.0
  %2672 = vmatprep.subr.mxu0 0.0
  %2673 = vmatpush1.msra.mxu0 0.0
  %2674 = vmatprep.subr.mxu0 0.0
  %2675 = vmatpush1.msra.mxu0 0.0
  %2676 = vmatprep.subr.mxu0 0.0
  %2677 = vmatpush1.msra.mxu0 0.0
  %2678 = vmatprep.subr.mxu0 0.0
  %2679 = vmatpush1.msra.mxu0 0.0
  %2680 = vmatprep.subr.mxu0 0.0
  %2681 = vmatpush1.msra.mxu0 0.0
  %2682 = vmatprep.subr.mxu0 0.0
  %2683 = vmatpush1.msra.mxu0 0.0
  %2684 = vmatprep.subr.mxu0 0.0
  %2685 = vmatpush1.msra.mxu0 0.0
  %2686 = vmatprep.subr.mxu0 0.0
  %2687 = vmatpush1.msra.mxu0 0.0
  %2688 = vmatprep.subr.mxu0 0.0
  %2689 = vmatpush1.msra.mxu0 0.0
  %2690 = vmatprep.subr.mxu0 0.0
  %2691 = vmatpush1.msra.mxu0 0.0
  %2692 = vmatprep.subr.mxu0 0.0
  %2693 = vmatpush1.msra.mxu0 0.0
  %2694 = vmatprep.subr.mxu0 0.0
  %2695 = vmatpush1.msra.mxu0 0.0
  %2696 = vmatprep.subr.mxu0 0.0
  %2697 = vmatpush1.msra.mxu0 0.0
  %2698 = vmatprep.mubr.f32.mxu0 0.0
  %2699 = vmatmul.mubr.f32.gmra.mrb[0].mxu0 %v2623
  %v2700 = vpop.f32.mrb[0].mxu0
  %v2701 = vadd.f32 0.0, %v2700
  %v2702 = vpop.f32.mrb[0].mxu0
  %2703 = vmatprep.mubr.f32.mxu0 0.0
  %2704 = vmatmul.mubr.f32.gmra.mrb[0].mxu0 %v2626
  %v2705 = vpop.f32.mrb[0].mxu0
  %v2706 = vadd.f32 0.0, %v2705
  %v2707 = vpop.f32.mrb[0].mxu0
  %2708 = vmatprep.mubr.f32.mxu0 0.0
  %2709 = vmatmul.mubr.f32.gmra.mrb[0].mxu0 %v2629
  %v2710 = vpop.f32.mrb[0].mxu0
  %v2711 = vadd.f32 0.0, %v2710
  %v2712 = vpop.f32.mrb[0].mxu0
  %2713 = vmatprep.mubr.f32.mxu0 0.0
  %2714 = vmatmul.mubr.f32.gmra.mrb[0].mxu0 %v2632
  %v2715 = vpop.f32.mrb[0].mxu0
  %v2716 = vadd.f32 0.0, %v2715
  %v2717 = vpop.f32.mrb[0].mxu0
  %2718 = vdwg.mxu0
  %v2719 = vadd.f32 %v2608, %v2701
  %v2720 = vadd.f32 %v2611, %v2706
  %v2721 = vadd.f32 %v2616, %v2711
  %v2722 = vadd.f32 %v2619, %v2716
  %v2723 = vlaneseq
  %v2724 = vshrl.u32 %v2723, 7
  %v2725 = vsub.s32 0, %v2724
  %v2726 = vrot.slane %v1944, %v2725
  %v2727 = vadd.f32 %v2719, %v2726
  %v2728 = vadd.f32 %v2720, %v2726
  %v2729 = vadd.f32 %v2721, %v2726
  %v2730 = vadd.f32 %v2722, %v2726
  %v2731 = vld [vmem:[%s5 + $0x108] sm:$0xff]
  %v2732 = vld [vmem:[%s5 + $0x110] sm:$0xff]
  %v2733 = vld [vmem:[%s5 + $0x118] sm:$0xff]
  %v2734 = vld [vmem:[%s5 + $0x120] sm:$0xff]
  %v2735 = vld [vmem:[%s5 + $0x128] sm:$0xff]
  %v2736 = vld [vmem:[%s5 + $0x130] sm:$0xff]
  %v2737 = vld [vmem:[%s5 + $0x138] sm:$0xff]
  %v2738 = vld [vmem:[%s5 + $0x140] sm:$0xff]
  %v2739 = vld [vmem:[%s5 + $0x148] sm:$0x1]
  %v2740 = vld [vmem:[%s5 + $0x150] sm:$0xff]
  %v2741 = vld [vmem:[%s5 + $0x158] sm:$0xff]
  %v2742 = vld [vmem:[%s5 + $0x160] sm:$0xff]
  %v2743 = vld [vmem:[%s5 + $0x168] sm:$0xff]
  %v2744 = vld [vmem:[%s5 + $0x170] sm:$0xff]
  %v2745 = vld [vmem:[%s5 + $0x178] sm:$0xff]
  %v2746 = vld [vmem:[%s5 + $0x180] sm:$0xff]
  %v2747 = vld [vmem:[%s5 + $0x188] sm:$0xff]
  %v2748 = vld [vmem:[%s5 + $0x190] sm:$0xff]
  %v2749 = vld [vmem:[%s5 + $0x198] sm:$0xff]
  %v2750 = vld [vmem:[%s5 + $0x1a0] sm:$0xff]
  %v2751 = vld [vmem:[%s5 + $0x1a8] sm:$0xff]
  %v2752 = vld [vmem:[%s5 + $0x1b0] sm:$0xff]
  %v2753 = vld [vmem:[%s5 + $0x1b8] sm:$0xff]
  %v2754 = vld [vmem:[%s5 + $0x1c0] sm:$0xff]
  %v2755 = vld [vmem:[%s5 + $0x1c8] sm:$0xff]
  %v2756 = vld [vmem:[%s5 + $0x1d0] sm:$0x1]
  %v2757 = vlaneseq
  %v2758 = vshrl.u32 %v2757, 7
  %v2759 = vsub.s32 0, %v2758
  %v2760 = vrot.slane %v2739, %v2759
  %v2762 = vsel %vm1539, %v2727, 0
  %2764 = vmatprep.subr.mxu0 0.0
  %2765 = vmatpush1.msra.mxu0 %v2731
  %2766 = vmatprep.subr.mxu0 0.0
  %2767 = vmatpush1.msra.mxu0 %v2732
  %2768 = vmatprep.subr.mxu0 0.0
  %2769 = vmatpush1.msra.mxu0 %v2733
  %2770 = vmatprep.subr.mxu0 0.0
  %2771 = vmatpush1.msra.mxu0 %v2734
  %2772 = vmatprep.subr.mxu0 0.0
  %2773 = vmatpush1.msra.mxu0 %v2735
  %2774 = vmatprep.subr.mxu0 0.0
  %2775 = vmatpush1.msra.mxu0 %v2736
  %2776 = vmatprep.subr.mxu0 0.0
  %2777 = vmatpush1.msra.mxu0 %v2737
  %2778 = vmatprep.subr.mxu0 0.0
  %2779 = vmatpush1.msra.mxu0 %v2738
  %2780 = vmatprep.subr.mxu0 0.0
  %2781 = vmatpush1.msra.mxu0 0.0
  %2782 = vmatprep.subr.mxu0 0.0
  %2783 = vmatpush1.msra.mxu0 0.0
  %2784 = vmatprep.subr.mxu0 0.0
  %2785 = vmatpush1.msra.mxu0 0.0
  %2786 = vmatprep.subr.mxu0 0.0
  %2787 = vmatpush1.msra.mxu0 0.0
  %2788 = vmatprep.subr.mxu0 0.0
  %2789 = vmatpush1.msra.mxu0 0.0
  %2790 = vmatprep.subr.mxu0 0.0
  %2791 = vmatpush1.msra.mxu0 0.0
  %2792 = vmatprep.subr.mxu0 0.0
  %2793 = vmatpush1.msra.mxu0 0.0
  %2794 = vmatprep.subr.mxu0 0.0
  %2795 = vmatpush1.msra.mxu0 0.0
  %2796 = vmatprep.subr.mxu0 0.0
  %2797 = vmatpush1.msra.mxu0 0.0
  %2798 = vmatprep.subr.mxu0 0.0
  %2799 = vmatpush1.msra.mxu0 0.0
  %2800 = vmatprep.subr.mxu0 0.0
  %2801 = vmatpush1.msra.mxu0 0.0
  %2802 = vmatprep.subr.mxu0 0.0
  %2803 = vmatpush1.msra.mxu0 0.0
  %2804 = vmatprep.subr.mxu0 0.0
  %2805 = vmatpush1.msra.mxu0 0.0
  %2806 = vmatprep.subr.mxu0 0.0
  %2807 = vmatpush1.msra.mxu0 0.0
  %2808 = vmatprep.subr.mxu0 0.0
  %2809 = vmatpush1.msra.mxu0 0.0
  %2810 = vmatprep.subr.mxu0 0.0
  %2811 = vmatpush1.msra.mxu0 0.0
  %2812 = vmatprep.subr.mxu0 0.0
  %2813 = vmatpush1.msra.mxu0 0.0
  %2814 = vmatprep.subr.mxu0 0.0
  %2815 = vmatpush1.msra.mxu0 0.0
  %2816 = vmatprep.subr.mxu0 0.0
  %2817 = vmatpush1.msra.mxu0 0.0
  %2818 = vmatprep.subr.mxu0 0.0
  %2819 = vmatpush1.msra.mxu0 0.0
  %2820 = vmatprep.subr.mxu0 0.0
  %2821 = vmatpush1.msra.mxu0 0.0
  %2822 = vmatprep.subr.mxu0 0.0
  %2823 = vmatpush1.msra.mxu0 0.0
  %2824 = vmatprep.subr.mxu0 0.0
  %2825 = vmatpush1.msra.mxu0 0.0
  %2826 = vmatprep.subr.mxu0 0.0
  %2827 = vmatpush1.msra.mxu0 0.0
  %2828 = vmatprep.mubr.f32.mxu0 0.0
  %2829 = vmatmul.mubr.f32.gmra.mrb[0].mxu0 %v2762
  %v2830 = vpop.f32.mrb[0].mxu0
  %v2831 = vadd.f32 %v2760, %v2830
  %v2832 = vpop.f32.mrb[0].mxu0
  %2833 = vdwg.mxu0
  %v2834 = vtanh.pop %v2831
  %v2835 = vlaneseq
  %v2836 = vshrl.u32 %v2835, 7
  %v2837 = vsub.s32 0, %v2836
  %v2838 = vrot.slane %v2756, %v2837
  %2839 = vmatprep.subr.mxu0 0.0
  %2840 = vmatpush1.msra.mxu0 %v2740
  %2841 = vmatprep.subr.mxu0 0.0
  %2842 = vmatpush1.msra.mxu0 %v2741
  %2843 = vmatprep.subr.mxu0 0.0
  %2844 = vmatpush1.msra.mxu0 %v2742
  %2845 = vmatprep.subr.mxu0 0.0
  %2846 = vmatpush1.msra.mxu0 %v2743
  %2847 = vmatprep.subr.mxu0 0.0
  %2848 = vmatpush1.msra.mxu0 %v2744
  %2849 = vmatprep.subr.mxu0 0.0
  %2850 = vmatpush1.msra.mxu0 %v2745
  %2851 = vmatprep.subr.mxu0 0.0
  %2852 = vmatpush1.msra.mxu0 %v2746
  %2853 = vmatprep.subr.mxu0 0.0
  %2854 = vmatpush1.msra.mxu0 %v2747
  %2855 = vmatprep.subr.mxu0 0.0
  %2856 = vmatpush1.msra.mxu0 %v2748
  %2857 = vmatprep.subr.mxu0 0.0
  %2858 = vmatpush1.msra.mxu0 %v2749
  %2859 = vmatprep.subr.mxu0 0.0
  %2860 = vmatpush1.msra.mxu0 %v2750
  %2861 = vmatprep.subr.mxu0 0.0
  %2862 = vmatpush1.msra.mxu0 %v2751
  %2863 = vmatprep.subr.mxu0 0.0
  %2864 = vmatpush1.msra.mxu0 %v2752
  %2865 = vmatprep.subr.mxu0 0.0
  %2866 = vmatpush1.msra.mxu0 %v2753
  %2867 = vmatprep.subr.mxu0 0.0
  %2868 = vmatpush1.msra.mxu0 %v2754
  %2869 = vmatprep.subr.mxu0 0.0
  %2870 = vmatpush1.msra.mxu0 %v2755
  %2871 = vmatprep.subr.mxu0 0.0
  %2872 = vmatpush1.msra.mxu0 0.0
  %2873 = vmatprep.subr.mxu0 0.0
  %2874 = vmatpush1.msra.mxu0 0.0
  %2875 = vmatprep.subr.mxu0 0.0
  %2876 = vmatpush1.msra.mxu0 0.0
  %2877 = vmatprep.subr.mxu0 0.0
  %2878 = vmatpush1.msra.mxu0 0.0
  %2879 = vmatprep.subr.mxu0 0.0
  %2880 = vmatpush1.msra.mxu0 0.0
  %2881 = vmatprep.subr.mxu0 0.0
  %2882 = vmatpush1.msra.mxu0 0.0
  %2883 = vmatprep.subr.mxu0 0.0
  %2884 = vmatpush1.msra.mxu0 0.0
  %2885 = vmatprep.subr.mxu0 0.0
  %2886 = vmatpush1.msra.mxu0 0.0
  %2887 = vmatprep.subr.mxu0 0.0
  %2888 = vmatpush1.msra.mxu0 0.0
  %2889 = vmatprep.subr.mxu0 0.0
  %2890 = vmatpush1.msra.mxu0 0.0
  %2891 = vmatprep.subr.mxu0 0.0
  %2892 = vmatpush1.msra.mxu0 0.0
  %2893 = vmatprep.subr.mxu0 0.0
  %2894 = vmatpush1.msra.mxu0 0.0
  %2895 = vmatprep.subr.mxu0 0.0
  %2896 = vmatpush1.msra.mxu0 0.0
  %2897 = vmatprep.subr.mxu0 0.0
  %2898 = vmatpush1.msra.mxu0 0.0
  %2899 = vmatprep.subr.mxu0 0.0
  %2900 = vmatpush1.msra.mxu0 0.0
  %2901 = vmatprep.subr.mxu0 0.0
  %2902 = vmatpush1.msra.mxu0 0.0
  %2903 = vmatprep.mubr.f32.mxu0 0.0
  %2904 = vmatmul.mubr.f32.gmra.mrb[0].mxu0 %v2834
  %v2905 = vpop.f32.mrb[0].mxu0
  %v2906 = vadd.f32 %v2838, %v2905
  %v2907 = vpop.f32.mrb[0].mxu0
  %2908 = vdwg.mxu0
  %v2910 = vsel %vm1539, %v2728, 0
  %v2913 = vsel %vm1539, %v2729, 0
  %v2916 = vsel %vm1539, %v2730, 0
  %2918 = vmatprep.subr.mxu0 0.0
  %2919 = vmatpush1.xpose.msra.mxu0 %v2913
  %2920 = vmatprep.subr.mxu0 0.0
  %2921 = vmatpush1.xpose.msra.mxu0 %v2916
  %2922 = vmatprep.subr.mxu0 0.0
  %2923 = vmatpush1.xpose.msra.mxu0 0.0
  %2924 = vmatprep.subr.mxu0 0.0
  %2925 = vmatpush1.xpose.msra.mxu0 0.0
  %2926 = vmatprep.subr.mxu0 0.0
  %2927 = vmatpush1.xpose.msra.mxu0 0.0
  %2928 = vmatprep.subr.mxu0 0.0
  %2929 = vmatpush1.xpose.msra.mxu0 0.0
  %2930 = vmatprep.subr.mxu0 0.0
  %2931 = vmatpush1.xpose.msra.mxu0 0.0
  %2932 = vmatprep.subr.mxu0 0.0
  %2933 = vmatpush1.xpose.msra.mxu0 0.0
  %2934 = vmatprep.subr.mxu0 0.0
  %2935 = vmatpush1.xpose.msra.mxu0 0.0
  %2936 = vmatprep.subr.mxu0 0.0
  %2937 = vmatpush1.xpose.msra.mxu0 0.0
  %2938 = vmatprep.subr.mxu0 0.0
  %2939 = vmatpush1.xpose.msra.mxu0 0.0
  %2940 = vmatprep.subr.mxu0 0.0
  %2941 = vmatpush1.xpose.msra.mxu0 0.0
  %2942 = vmatprep.subr.mxu0 0.0
  %2943 = vmatpush1.xpose.msra.mxu0 0.0
  %2944 = vmatprep.subr.mxu0 0.0
  %2945 = vmatpush1.xpose.msra.mxu0 0.0
  %2946 = vmatprep.subr.mxu0 0.0
  %2947 = vmatpush1.xpose.msra.mxu0 0.0
  %2948 = vmatprep.subr.mxu0 0.0
  %2949 = vmatpush1.xpose.msra.mxu0 0.0
  %2950 = vmatprep.subr.mxu0 0.0
  %2951 = vmatpush1.xpose.msra.mxu0 0.0
  %2952 = vmatprep.subr.mxu0 0.0
  %2953 = vmatpush1.xpose.msra.mxu0 0.0
  %2954 = vmatprep.subr.mxu0 0.0
  %2955 = vmatpush1.xpose.msra.mxu0 0.0
  %2956 = vmatprep.subr.mxu0 0.0
  %2957 = vmatpush1.xpose.msra.mxu0 0.0
  %2958 = vmatprep.subr.mxu0 0.0
  %2959 = vmatpush1.xpose.msra.mxu0 0.0
  %2960 = vmatprep.subr.mxu0 0.0
  %2961 = vmatpush1.xpose.msra.mxu0 0.0
  %2962 = vmatprep.subr.mxu0 0.0
  %2963 = vmatpush1.xpose.msra.mxu0 0.0
  %2964 = vmatprep.subr.mxu0 0.0
  %2965 = vmatpush1.xpose.msra.mxu0 0.0
  %2966 = vmatprep.subr.mxu0 0.0
  %2967 = vmatpush1.xpose.msra.mxu0 0.0
  %2968 = vmatprep.subr.mxu0 0.0
  %2969 = vmatpush1.xpose.msra.mxu0 0.0
  %2970 = vmatprep.subr.mxu0 0.0
  %2971 = vmatpush1.xpose.msra.mxu0 0.0
  %2972 = vmatprep.subr.mxu0 0.0
  %2973 = vmatpush1.xpose.msra.mxu0 0.0
  %2974 = vmatprep.subr.mxu0 0.0
  %2975 = vmatpush1.xpose.msra.mxu0 0.0
  %2976 = vmatprep.subr.mxu0 0.0
  %2977 = vmatpush1.xpose.msra.mxu0 0.0
  %2978 = vmatprep.subr.mxu0 0.0
  %2979 = vmatpush1.xpose.msra.mxu0 0.0
  %2980 = vmatprep.subr.mxu0 0.0
  %2981 = vmatpush1.xpose.msra.mxu0 0.0
  %2982 = vmatprep.mubr.f32.mxu0 0.0
  %2983 = vmatmul.mubr.f32.gmra.mrb[0].mxu0 %v2910
  %v2984 = vpop.f32.mrb[0].mxu0
  %v2985 = vadd.f32 0.0, %v2984
  %v2986 = vpop.f32.mrb[0].mxu0
  %2987 = vdwg.mxu0
  %v2988 = vlaneseq
  %v2989 = vand.u32 %v2988, 127
  %vm2990 = vcmp.lt.s32.totalorder %v2989, 15
  %v2991 = vsel %vm2990, %v2985, -inf
  %v2992 = vsel %vm1158, %v2991, -inf
  %2993 = vmax.xlane.f32.xlu0 %v2992
  %v2994 = vpop.xlane.xlu0 %2993
  %v2995 = vsub.f32 %v2991, %v2994
  %v2996 = vmul.f32 %v2995, 1.442695
  %v2997 = vpow.pop %v2996
  %v2998 = vsel %vm1158, %v2997, 0.0
  %2999 = vadd.xlane.f32.xlu0 %v2998
  %v3000 = vpop.xlane.xlu0 %2999
  %v3001 = vrcp.pop %v3000
  %v3002 = vmul.f32 %v2997, %v3001
  %v3003 = vsel %vm1158, %v3002, -inf
  %3004 = vmax.xlane.f32.xlu0 %v3003
  %v3005 = vpop.xlane.xlu0 %3004
  %v3006 = vld [vmem:[%s1 + $0x20] sm:$0x1]
  %v3007 = vlaneseq
  %v3008 = vshrl.u32 %v3007, 7
  %v3009 = vsub.s32 0, %v3008
  %v3010 = vrot.slane %v3006, %v3009
  %v3011 = vmul.f32 %v3002, %v3010
  %v3012 = vsel %vm1158, %v3011, 0.0
  %3013 = vadd.xlane.f32.xlu0 %v3012
  %v3014 = vpop.xlane.xlu0 %3013
  %vm3015 = vcmp.lt.s32.totalorder %v2989, 7
  %v3016 = vsel %vm3015, %v2906, -inf
  %3017 = vmax.xlane.f32.xlu0 %v3016
  %v3018 = vpop.xlane.xlu0 %3017
  %v3019 = vsub.f32 %v3016, %v3018
  %v3020 = vmul.f32 %v3019, 1.442695
  %v3021 = vpow.pop %v3020
  %3022 = vadd.xlane.f32.xlu0 %v3021
  %v3023 = vpop.xlane.xlu0 %3022
  %v3024 = vlog2.pop %v3023
  %v3025 = vmul.f32 %v3024, 0.6931472
  %v3026 = vadd.f32 %v3018, %v3025
  %v3027 = vsub.f32 %v2906, %v3026
  %v3028 = vsel %vm3015, %v3027, %v2906
  %vm3029 = vcmp.eq.s32.totalorder %v2989, 8
  %v3030 = vsel %vm3029, %v3014, %v3028
  %vm3031 = vcmp.eq.s32.totalorder %v2989, 9
  %v3032 = vsel %vm3031, %v3005, %v3030
  %3033 = vst [vmem:[%s6] sm:$0xff] %v3032
  // Predicated region
  $region26: #{ac_forward.1} parent=0 // pred_check
    _
  $region27: #{ac_forward.1} parent=0 // pred_check_branch
    %3035 = sbr.rel (0) target = $region29
  $region28: #{ac_forward.1} parent=0 // pred_region
    _
  $region29: #{ac_forward.1} parent=0 // pred_fallthru
    _
  // Predicated region
  $region30: #{ac_forward.1} parent=0 // pred_check
    _
  $region31: #{ac_forward.1} parent=0 // pred_check_branch
    %3037 = sbr.rel (0) target = $region33
  $region32: #{ac_forward.1} parent=0 // pred_region
    _
  $region33: #{ac_forward.1} parent=0 // pred_fallthru
    _

</llo_original>
